<compile_context>
chip_gen: v7x
topology: tpu7x:2x2x1
jax: 0.10.0
libtpu: 0.0.40
codegen_flags: <defaults>
</compile_context>

<pallas_src>
import functools

import jax
import jax.numpy as jnp
from jax.experimental import pallas as pl
from jax.experimental.pallas import tpu as pltpu

_MIB = 1024 * 1024


def _round_up(x, m):
    return (x + m - 1) // m * m


def _vmem_capacity_bytes():
    """Per-core VMEM capacity; conservative fallback if the query fails."""
    try:
        info = pltpu.get_tpu_info()
        for name in ("vmem_capacity_bytes", "vmem_size_bytes", "vmem_bytes"):
            cap = getattr(info, name, None)
            if cap:
                return int(cap)
    except Exception:
        pass
    return 64 * _MIB  # smallest current generation (v7x per-TC)


def _swish_f32(x):
    # x * sigmoid(x) == x / (1 + exp(-x)).  Exact divide (not approx
    # reciprocal): negligible cost on 2*TB*256 elements, better accuracy.
    return x / (1.0 + jnp.exp(-x))


# --------------------------------------------------------------------------
# Kernels
# --------------------------------------------------------------------------
def _encoder_kernel_resident(
    x_ref,    # (TB, D)     f32  flattened-image tile (cast to bf16 in-kernel)
    w1_ref,   # (D, 256)    bf16 resident fc1 weight
    b1_ref,   # (1, 256)    f32
    w2_ref,   # (256, 256)  bf16
    b2_ref,   # (1, 256)    f32
    w3_ref,   # (256, NOUT) bf16 fused [fc31 | fc32 | zero-pad]
    b3_ref,   # (1, NOUT)   f32
    out_ref,  # (TB, NOUT)  f32  fused [mu | logvar | zero-pad]
):
    h = jnp.dot(x_ref[...].astype(w1_ref.dtype), w1_ref[...],
                preferred_element_type=jnp.float32) + b1_ref[...]
    h = _swish_f32(h)
    h = jnp.dot(h.astype(w2_ref.dtype), w2_ref[...],
                preferred_element_type=jnp.float32) + b2_ref[...]
    h = _swish_f32(h)
    out_ref[...] = (
        jnp.dot(h.astype(w3_ref.dtype), w3_ref[...],
                preferred_element_type=jnp.float32) + b3_ref[...]
    ).astype(out_ref.dtype)


def _encoder_kernel_ktiled(
    x_ref,    # (TB, TK)    f32
    w1_ref,   # (TK, 256)   bf16 fc1 weight K-tile
    b1_ref,   # (1, 256)    f32
    w2_ref,   # (256, 256)  bf16
    b2_ref,   # (1, 256)    f32
    w3_ref,   # (256, NOUT) bf16
    b3_ref,   # (1, NOUT)   f32
    out_ref,  # (TB, NOUT)  f32
    acc_ref,  # (TB, 256)   f32  scratch: fc1 accumulator
):
    k = pl.program_id(1)

    @pl.when(k == 0)
    def _():
        acc_ref[...] = jnp.zeros_like(acc_ref)

    acc_ref[...] += jnp.dot(x_ref[...].astype(w1_ref.dtype), w1_ref[...],
                            preferred_element_type=jnp.float32)

    @pl.when(k == pl.num_programs(1) - 1)
    def _():
        h = _swish_f32(acc_ref[...] + b1_ref[...])
        h = _swish_f32(
            jnp.dot(h.astype(w2_ref.dtype), w2_ref[...],
                    preferred_element_type=jnp.float32) + b2_ref[...])
        out_ref[...] = (
            jnp.dot(h.astype(w3_ref.dtype), w3_ref[...],
                    preferred_element_type=jnp.float32) + b3_ref[...]
        ).astype(out_ref.dtype)


# --------------------------------------------------------------------------
# Static tiling decisions (plain Python, trace time)
# --------------------------------------------------------------------------
def _select_tiling(B, D, L, vmem_budget):
    NOUT = _round_up(2 * L, 128)
    B8 = _round_up(max(B, 1), 8)

    # Batch tile: as large as the VMEM budget allows, but
    #  * >= 2 batch tiles whenever B >= 16 (megacore on v7x needs a
    #    multi-iteration "parallel" axis),
    #  * capped at 512 on small-VMEM parts / 1024 on 128-MiB parts.
    tb_hw_cap = 512 if vmem_budget <= 48 * _MIB else 1024
    if B >= 16:
        tb_cap = min(tb_hw_cap, max(8, _round_up((B + 1) // 2, 8)))
    else:
        tb_cap = min(tb_hw_cap, B8)

    # Residents budgeted at 2 buffers (worst case, in case Buffered(1) is
    # not honored by this JAX build).
    resident_common = 2 * (256 * 256 * 2 + 256 * NOUT * 2
                           + (256 + 256 + NOUT) * 4)

    def mode_a_bytes(tb):
        return (2 * tb * D * 4            # x tile (f32, double buffered)
                + 2 * D * 256 * 2         # resident W1 (bf16, worst case 2 bufs)
                + resident_common
                + 2 * tb * NOUT * 4       # out tile (double buffered)
                + 4 * tb * 256 * 4)       # headroom for h temporaries

    tb = tb_cap
    while tb > 8 and mode_a_bytes(tb) > vmem_budget:
        tb = max(8, _round_up(tb // 2, 8))
    if mode_a_bytes(tb) <= vmem_budget:
        return dict(mode="resident", TB=tb, TK=D, NOUT=NOUT,
                    B_pad=_round_up(B, tb), D_pad=D)

    # ---- fallback for very large D: K-tiled fc1 reduction, big TK ----
    def mode_b_bytes(tb, tk):
        return (2 * tb * tk * 4           # x tile
                + 2 * tk * 256 * 2        # W1 K-tile (double buffered)
                + resident_common
                + 2 * tb * NOUT * 4
                + tb * 256 * 4            # acc scratch
                + 3 * tb * 256 * 4)       # h temporaries

    best = (8, 512)
    for tb in (512, 256, 128, 64, 32, 16, 8):
        if tb > tb_cap:
            continue
        for tk in (4096, 2048, 1024, 512):
            if mode_b_bytes(tb, tk) <= vmem_budget:
                if tb * tk > best[0] * best[1]:
                    best = (tb, tk)
                break
    tb, tk = best
    return dict(mode="ktiled", TB=tb, TK=tk, NOUT=NOUT,
                B_pad=_round_up(B, tb), D_pad=_round_up(D, tk))


# --------------------------------------------------------------------------
# Wrapper
# --------------------------------------------------------------------------
@functools.partial(jax.jit, static_argnames=("nc", "nv", "nh", "min_buffered"))
def _forward_impl(x_nchw, params, *, nc, nv, nh, min_buffered):
    (w1, b1, w2, b2, w31, b31, w32, b32) = params
    B = x_nchw.shape[0]
    D = nc * nv * nh
    L = w31.shape[1]

    cap = _vmem_capacity_bytes()
    vmem_limit = min(int(cap * 0.75), 100 * _MIB)   # 48 MiB on v7x, 96 MiB on v5e/v6e
    budget = int(vmem_limit * 0.85)                 # slack for compiler temporaries

    t = _select_tiling(B, D, L, budget)
    TB, TK, NOUT = t["TB"], t["TK"], t["NOUT"]
    B_pad, D_pad = t["B_pad"], t["D_pad"]
    resident_mode = t["mode"] == "resident"
    num_bt = B_pad // TB

    # x stays f32 and is cast to bf16 inside the kernel; pad only if needed.
    x = x_nchw.reshape(B, D)                        # same flatten order as torch
    if B_pad != B or D_pad != D:
        x = jnp.pad(x, ((0, B_pad - B), (0, D_pad - D)))

    w1p = w1.astype(jnp.bfloat16)
    if D_pad != D:
        w1p = jnp.pad(w1p, ((0, D_pad - D), (0, 0)))
    w2p = w2.astype(jnp.bfloat16)
    w3 = jnp.concatenate([w31, w32], axis=1)        # (256, 2L) fused head
    w3p = jnp.pad(w3, ((0, 0), (0, NOUT - 2 * L))).astype(jnp.bfloat16)
    b3p = jnp.pad(jnp.concatenate([b31, b32], axis=1),
                  ((0, 0), (0, NOUT - 2 * L)))      # f32

    def resident_spec(shape, index_map):
        # Constant-index operands don't need double buffering.
        if min_buffered:
            return pl.BlockSpec(shape, index_map, pipeline_mode=pl.Buffered(1))
        return pl.BlockSpec(shape, index_map)

    w1_reads = 1 if resident_mode else num_bt
    cost = pl.CostEstimate(
        flops=2 * B_pad * (D_pad * 256 + 256 * 256 + 256 * NOUT),
        transcendentals=B_pad * 512,                # two 256-wide swish exps/row
        bytes_accessed=(B_pad * D_pad * 4           # x (f32, read once)
                        + w1_reads * D_pad * 256 * 2
                        + 256 * 256 * 2 + 256 * NOUT * 2 + (512 + NOUT) * 4
                        + B_pad * NOUT * 4),
    )

    cparams = pltpu.CompilerParams(
        dimension_semantics=("parallel",) if resident_mode
        else ("parallel", "arbitrary"),
        vmem_limit_bytes=int(vmem_limit),
    )

    if resident_mode:
        grid = (num_bt,)
        in_specs = [
            pl.BlockSpec((TB, D_pad), lambda i: (i, 0)),          # x tile
            resident_spec((D_pad, 256), lambda i: (0, 0)),        # W1 resident
            resident_spec((1, 256), lambda i: (0, 0)),            # b1
            resident_spec((256, 256), lambda i: (0, 0)),          # w2
            resident_spec((1, 256), lambda i: (0, 0)),            # b2
            resident_spec((256, NOUT), lambda i: (0, 0)),         # w3 fused
            resident_spec((1, NOUT), lambda i: (0, 0)),           # b3 fused
        ]
        out_specs = pl.BlockSpec((TB, NOUT), lambda i: (i, 0))
        kernel = _encoder_kernel_resident
        scratch = ()
    else:
        grid = (num_bt, D_pad // TK)
        in_specs = [
            pl.BlockSpec((TB, TK), lambda i, k: (i, k)),          # x tile
            pl.BlockSpec((TK, 256), lambda i, k: (k, 0)),         # W1 K-tile
            resident_spec((1, 256), lambda i, k: (0, 0)),         # b1
            resident_spec((256, 256), lambda i, k: (0, 0)),       # w2
            resident_spec((1, 256), lambda i, k: (0, 0)),         # b2
            resident_spec((256, NOUT), lambda i, k: (0, 0)),      # w3 fused
            resident_spec((1, NOUT), lambda i, k: (0, 0)),        # b3 fused
        ]
        out_specs = pl.BlockSpec((TB, NOUT), lambda i, k: (i, 0))
        kernel = _encoder_kernel_ktiled
        scratch = (pltpu.VMEM((TB, 256), jnp.float32),)

    out = pl.pallas_call(
        kernel,
        out_shape=jax.ShapeDtypeStruct((B_pad, NOUT), jnp.float32),
        grid_spec=pltpu.PrefetchScalarGridSpec(
            num_scalar_prefetch=0,
            grid=grid,
            in_specs=in_specs,
            out_specs=out_specs,
            scratch_shapes=scratch,
        ),
        compiler_params=cparams,
        cost_estimate=cost,
    )(x, w1p, b1, w2p, b2, w3p, b3p)

    mu = out[:B, :L]
    logvar = out[:B, L:2 * L]
    return mu, logvar


def image_encoder_forward(x_nchw, params, *, nc, nv, nh):
    """x_nchw: (B, nc, nv, nh) float32. Returns (mu, logvar), each (B, n_latents)."""
    try:
        return _forward_impl(x_nchw, params, nc=nc, nv=nv, nh=nh,
                             min_buffered=True)
    except Exception:
        # Fallback if this JAX build rejects pipeline_mode=pl.Buffered(1)
        # on resident BlockSpecs; semantics are identical.
        return _forward_impl(x_nchw, params, nc=nc, nv=nv, nh=nh,
                             min_buffered=False)


# --------------------------------------------------------------------------
# Params / reference
# --------------------------------------------------------------------------
def init_params(key, n_latents, nc, nv, nh):
    """Deterministic init mimicking nn.Linear default (uniform +/- 1/sqrt(fan_in)).

    Weights are stored as (in_features, out_features)."""
    D = nc * nv * nh

    def linear(key, fan_in, fan_out):
        kw, kb = jax.random.split(key)
        bound = 1.0 / jnp.sqrt(fan_in)
        w = jax.random.uniform(kw, (fan_in, fan_out), jnp.float32, -bound, bound)
        b = jax.random.uniform(kb, (1, fan_out), jnp.float32, -bound, bound)
        return w, b

    k1, k2, k3, k4 = jax.random.split(key, 4)
    w1, b1 = linear(k1, D, 256)
    w2, b2 = linear(k2, 256, 256)
    w31, b31 = linear(k3, 256, n_latents)
    w32, b32 = linear(k4, 256, n_latents)
    return (w1, b1, w2, b2, w31, b31, w32, b32)


def _reference(x_nchw, params, nc, nv, nh):
    (w1, b1, w2, b2, w31, b31, w32, b32) = params
    x = x_nchw.reshape(x_nchw.shape[0], nc * nv * nh)
    sw = lambda t: t * jax.nn.sigmoid(t)
    h = sw(x @ w1 + b1)
    h = sw(h @ w2 + b2)
    return h @ w31 + b31, h @ w32 + b32


if __name__ == "__main__":
    # Small shapes consistent with the module: batch=2, nc=4, nv=16, nh=16,
    # n_latents=32  ->  flattened input dim D = 1024 (W1 resident, K collapsed).
    B, nc, nv, nh, n_latents = 2, 4, 16, 16, 32

    key = jax.random.PRNGKey(0)
    k_x, k_p = jax.random.split(key)
    x = jax.random.normal(k_x, (B, nc, nv, nh), jnp.float32)
    params = init_params(k_p, n_latents, nc, nv, nh)

    mu, logvar = image_encoder_forward(x, params, nc=nc, nv=nv, nh=nh)
    jax.block_until_ready((mu, logvar))

    # correctness check against plain-JAX f32 reference.
    # bf16 MXU operands with f32 accumulation => expect ~1e-3..1e-2 abs error.
    mu_ref, lv_ref = _reference(x, params, nc, nv, nh)
    assert mu.shape == (B, n_latents) and logvar.shape == (B, n_latents)
    assert jnp.allclose(mu, mu_ref, atol=2e-2, rtol=2e-2)
    assert jnp.allclose(logvar, lv_ref, atol=2e-2, rtol=2e-2)

    print("KERNEL_OK")
</pallas_src>

<mosaic_0001>
module attributes {stable_mosaic.version = 11 : i64} {
  func.func @_encoder_kernel_resident(%arg0: i32, %arg1: memref<8x1024xf32, #tpu.memory_space<vmem>>, %arg2: memref<1024x256xbf16, #tpu.memory_space<vmem>>, %arg3: memref<1x256xf32, #tpu.memory_space<vmem>>, %arg4: memref<256x256xbf16, #tpu.memory_space<vmem>>, %arg5: memref<1x256xf32, #tpu.memory_space<vmem>>, %arg6: memref<256x128xbf16, #tpu.memory_space<vmem>>, %arg7: memref<1x128xf32, #tpu.memory_space<vmem>>, %arg8: memref<8x128xf32, #tpu.memory_space<vmem>>) attributes {dimension_semantics = [#tpu.dimension_semantics<parallel>], iteration_bounds = array<i64: 1>, scalar_prefetch = 0 : i64, scratch_operands = 0 : i64, tpu.core_type = #tpu.core_type<tc>, window_params = [{transform_indices = @transform_0, window_bounds = array<i64: 8, 1024>}, {pipeline_mode = #tpu.pipeline_mode<synchronous>, transform_indices = @transform_1, window_bounds = array<i64: 1024, 256>}, {pipeline_mode = #tpu.pipeline_mode<synchronous>, transform_indices = @transform_2, window_bounds = array<i64: 1, 256>}, {pipeline_mode = #tpu.pipeline_mode<synchronous>, transform_indices = @transform_3, window_bounds = array<i64: 256, 256>}, {pipeline_mode = #tpu.pipeline_mode<synchronous>, transform_indices = @transform_4, window_bounds = array<i64: 1, 256>}, {pipeline_mode = #tpu.pipeline_mode<synchronous>, transform_indices = @transform_5, window_bounds = array<i64: 256, 128>}, {pipeline_mode = #tpu.pipeline_mode<synchronous>, transform_indices = @transform_6, window_bounds = array<i64: 1, 128>}, {transform_indices = @transform_7, window_bounds = array<i64: 8, 128>}]} {
    %c0 = arith.constant 0 : index
    %c0_0 = arith.constant 0 : index
    %0 = vector.load %arg1[%c0, %c0_0] : memref<8x1024xf32, #tpu.memory_space<vmem>>, vector<8x1024xf32>
    %1 = arith.truncf %0 : vector<8x1024xf32> to vector<8x1024xbf16>
    %c0_1 = arith.constant 0 : index
    %c0_2 = arith.constant 0 : index
    %2 = vector.load %arg2[%c0_1, %c0_2] : memref<1024x256xbf16, #tpu.memory_space<vmem>>, vector<1024x256xbf16>
    %cst = arith.constant dense<0.000000e+00> : vector<8x256xf32>
    %3 = tpu.matmul %1, %2, %cst {dimension_numbers = #tpu.dot_dimension_numbers<[1], [0], [0], [1], [0, 0, 1, 1], [], []>} : vector<8x1024xbf16>, vector<1024x256xbf16>, vector<8x256xf32> -> vector<8x256xf32>
    %c0_3 = arith.constant 0 : index
    %c0_4 = arith.constant 0 : index
    %4 = vector.load %arg3[%c0_3, %c0_4] : memref<1x256xf32, #tpu.memory_space<vmem>>, vector<1x256xf32>
    %5 = vector.broadcast %4 : vector<1x256xf32> to vector<8x256xf32>
    %6 = arith.addf %3, %5 : vector<8x256xf32>
    %cst_5 = arith.constant 0.000000e+00 : f32
    %7 = vector.broadcast %cst_5 : f32 to vector<8x256xf32>
    %8 = arith.subf %7, %6 : vector<8x256xf32>
    %9 = math.exp %8 : vector<8x256xf32>
    %cst_6 = arith.constant 1.000000e+00 : f32
    %10 = vector.broadcast %cst_6 : f32 to vector<8x256xf32>
    %11 = arith.addf %10, %9 : vector<8x256xf32>
    %12 = arith.divf %6, %11 : vector<8x256xf32>
    %13 = arith.truncf %12 : vector<8x256xf32> to vector<8x256xbf16>
    %c0_7 = arith.constant 0 : index
    %c0_8 = arith.constant 0 : index
    %14 = vector.load %arg4[%c0_7, %c0_8] : memref<256x256xbf16, #tpu.memory_space<vmem>>, vector<256x256xbf16>
    %cst_9 = arith.constant dense<0.000000e+00> : vector<8x256xf32>
    %15 = tpu.matmul %13, %14, %cst_9 {dimension_numbers = #tpu.dot_dimension_numbers<[1], [0], [0], [1], [0, 0, 1, 1], [], []>} : vector<8x256xbf16>, vector<256x256xbf16>, vector<8x256xf32> -> vector<8x256xf32>
    %c0_10 = arith.constant 0 : index
    %c0_11 = arith.constant 0 : index
    %16 = vector.load %arg5[%c0_10, %c0_11] : memref<1x256xf32, #tpu.memory_space<vmem>>, vector<1x256xf32>
    %17 = vector.broadcast %16 : vector<1x256xf32> to vector<8x256xf32>
    %18 = arith.addf %15, %17 : vector<8x256xf32>
    %cst_12 = arith.constant 0.000000e+00 : f32
    %19 = vector.broadcast %cst_12 : f32 to vector<8x256xf32>
    %20 = arith.subf %19, %18 : vector<8x256xf32>
    %21 = math.exp %20 : vector<8x256xf32>
    %cst_13 = arith.constant 1.000000e+00 : f32
    %22 = vector.broadcast %cst_13 : f32 to vector<8x256xf32>
    %23 = arith.addf %22, %21 : vector<8x256xf32>
    %24 = arith.divf %18, %23 : vector<8x256xf32>
    %25 = arith.truncf %24 : vector<8x256xf32> to vector<8x256xbf16>
    %c0_14 = arith.constant 0 : index
    %c0_15 = arith.constant 0 : index
    %26 = vector.load %arg6[%c0_14, %c0_15] : memref<256x128xbf16, #tpu.memory_space<vmem>>, vector<256x128xbf16>
    %cst_16 = arith.constant dense<0.000000e+00> : vector<8x128xf32>
    %27 = tpu.matmul %25, %26, %cst_16 {dimension_numbers = #tpu.dot_dimension_numbers<[1], [0], [0], [1], [0, 0, 1, 1], [], []>} : vector<8x256xbf16>, vector<256x128xbf16>, vector<8x128xf32> -> vector<8x128xf32>
    %c0_17 = arith.constant 0 : index
    %c0_18 = arith.constant 0 : index
    %28 = vector.load %arg7[%c0_17, %c0_18] : memref<1x128xf32, #tpu.memory_space<vmem>>, vector<1x128xf32>
    %29 = vector.broadcast %28 : vector<1x128xf32> to vector<8x128xf32>
    %30 = arith.addf %27, %29 : vector<8x128xf32>
    %c0_19 = arith.constant 0 : index
    %c0_20 = arith.constant 0 : index
    %31 = vector.load %arg8[%c0_19, %c0_20] : memref<8x128xf32, #tpu.memory_space<vmem>>, vector<8x128xf32>
    tpu.vector_store %arg8[%c0_19, %c0_20], %30 {strides = array<i32>} : memref<8x128xf32, #tpu.memory_space<vmem>>, vector<8x128xf32>,
    return
  }
  func.func @transform_0(%arg0: i32) -> (i32, i32) {
    %c0_i32 = arith.constant 0 : i32
    %c0_i32_0 = arith.constant 0 : i32
    return %arg0, %c0_i32 : i32, i32
  }
  func.func @transform_1(%arg0: i32) -> (i32, i32) {
    %c0_i32 = arith.constant 0 : i32
    %c0_i32_0 = arith.constant 0 : i32
    %c0_i32_1 = arith.constant 0 : i32
    return %c0_i32, %c0_i32_0 : i32, i32
  }
  func.func @transform_2(%arg0: i32) -> (i32, i32) {
    %c0_i32 = arith.constant 0 : i32
    %c0_i32_0 = arith.constant 0 : i32
    %c0_i32_1 = arith.constant 0 : i32
    return %c0_i32, %c0_i32_0 : i32, i32
  }
  func.func @transform_3(%arg0: i32) -> (i32, i32) {
    %c0_i32 = arith.constant 0 : i32
    %c0_i32_0 = arith.constant 0 : i32
    %c0_i32_1 = arith.constant 0 : i32
    return %c0_i32, %c0_i32_0 : i32, i32
  }
  func.func @transform_4(%arg0: i32) -> (i32, i32) {
    %c0_i32 = arith.constant 0 : i32
    %c0_i32_0 = arith.constant 0 : i32
    %c0_i32_1 = arith.constant 0 : i32
    return %c0_i32, %c0_i32_0 : i32, i32
  }
  func.func @transform_5(%arg0: i32) -> (i32, i32) {
    %c0_i32 = arith.constant 0 : i32
    %c0_i32_0 = arith.constant 0 : i32
    %c0_i32_1 = arith.constant 0 : i32
    return %c0_i32, %c0_i32_0 : i32, i32
  }
  func.func @transform_6(%arg0: i32) -> (i32, i32) {
    %c0_i32 = arith.constant 0 : i32
    %c0_i32_0 = arith.constant 0 : i32
    %c0_i32_1 = arith.constant 0 : i32
    return %c0_i32, %c0_i32_0 : i32, i32
  }
  func.func @transform_7(%arg0: i32) -> (i32, i32) {
    %c0_i32 = arith.constant 0 : i32
    %c0_i32_0 = arith.constant 0 : i32
    return %arg0, %c0_i32 : i32, i32
  }
}

module attributes {stable_mosaic.version = 11 : i64} {
  func.func @_encoder_kernel_resident(%arg0: i32, %arg1: memref<8x1024xf32, #tpu.memory_space<vmem>>, %arg2: memref<1024x256xbf16, #tpu.memory_space<vmem>>, %arg3: memref<1x256xf32, #tpu.memory_space<vmem>>, %arg4: memref<256x256xbf16, #tpu.memory_space<vmem>>, %arg5: memref<1x256xf32, #tpu.memory_space<vmem>>, %arg6: memref<256x128xbf16, #tpu.memory_space<vmem>>, %arg7: memref<1x128xf32, #tpu.memory_space<vmem>>, %arg8: memref<8x128xf32, #tpu.memory_space<vmem>>) attributes {dimension_semantics = [#tpu.dimension_semantics<parallel>], iteration_bounds = array<i64: 1>, scalar_prefetch = 0 : i64, scratch_operands = 0 : i64, tpu.core_type = #tpu.core_type<tc>, window_params = [{transform_indices = @transform_0, window_bounds = array<i64: 8, 1024>}, {pipeline_mode = #tpu.pipeline_mode<synchronous>, transform_indices = @transform_1, window_bounds = array<i64: 1024, 256>}, {pipeline_mode = #tpu.pipeline_mode<synchronous>, transform_indices = @transform_2, window_bounds = array<i64: 1, 256>}, {pipeline_mode = #tpu.pipeline_mode<synchronous>, transform_indices = @transform_3, window_bounds = array<i64: 256, 256>}, {pipeline_mode = #tpu.pipeline_mode<synchronous>, transform_indices = @transform_4, window_bounds = array<i64: 1, 256>}, {pipeline_mode = #tpu.pipeline_mode<synchronous>, transform_indices = @transform_5, window_bounds = array<i64: 256, 128>}, {pipeline_mode = #tpu.pipeline_mode<synchronous>, transform_indices = @transform_6, window_bounds = array<i64: 1, 128>}, {transform_indices = @transform_7, window_bounds = array<i64: 8, 128>}]} {
    %c0 = arith.constant 0 : index
    %c0_0 = arith.constant 0 : index
    %0 = vector.load %arg1[%c0, %c0_0] : memref<8x1024xf32, #tpu.memory_space<vmem>>, vector<8x1024xf32>
    %1 = arith.truncf %0 : vector<8x1024xf32> to vector<8x1024xbf16>
    %c0_1 = arith.constant 0 : index
    %c0_2 = arith.constant 0 : index
    %2 = vector.load %arg2[%c0_1, %c0_2] : memref<1024x256xbf16, #tpu.memory_space<vmem>>, vector<1024x256xbf16>
    %cst = arith.constant dense<0.000000e+00> : vector<8x256xf32>
    %3 = tpu.matmul %1, %2, %cst {dimension_numbers = #tpu.dot_dimension_numbers<[1], [0], [0], [1], [0, 0, 1, 1], [], []>} : vector<8x1024xbf16>, vector<1024x256xbf16>, vector<8x256xf32> -> vector<8x256xf32>
    %c0_3 = arith.constant 0 : index
    %c0_4 = arith.constant 0 : index
    %4 = vector.load %arg3[%c0_3, %c0_4] : memref<1x256xf32, #tpu.memory_space<vmem>>, vector<1x256xf32>
    %5 = vector.broadcast %4 : vector<1x256xf32> to vector<8x256xf32>
    %6 = arith.addf %3, %5 : vector<8x256xf32>
    %cst_5 = arith.constant 0.000000e+00 : f32
    %7 = vector.broadcast %cst_5 : f32 to vector<8x256xf32>
    %8 = arith.subf %7, %6 : vector<8x256xf32>
    %9 = math.exp %8 : vector<8x256xf32>
    %cst_6 = arith.constant 1.000000e+00 : f32
    %10 = vector.broadcast %cst_6 : f32 to vector<8x256xf32>
    %11 = arith.addf %10, %9 : vector<8x256xf32>
    %12 = arith.divf %6, %11 : vector<8x256xf32>
    %13 = arith.truncf %12 : vector<8x256xf32> to vector<8x256xbf16>
    %c0_7 = arith.constant 0 : index
    %c0_8 = arith.constant 0 : index
    %14 = vector.load %arg4[%c0_7, %c0_8] : memref<256x256xbf16, #tpu.memory_space<vmem>>, vector<256x256xbf16>
    %cst_9 = arith.constant dense<0.000000e+00> : vector<8x256xf32>
    %15 = tpu.matmul %13, %14, %cst_9 {dimension_numbers = #tpu.dot_dimension_numbers<[1], [0], [0], [1], [0, 0, 1, 1], [], []>} : vector<8x256xbf16>, vector<256x256xbf16>, vector<8x256xf32> -> vector<8x256xf32>
    %c0_10 = arith.constant 0 : index
    %c0_11 = arith.constant 0 : index
    %16 = vector.load %arg5[%c0_10, %c0_11] : memref<1x256xf32, #tpu.memory_space<vmem>>, vector<1x256xf32>
    %17 = vector.broadcast %16 : vector<1x256xf32> to vector<8x256xf32>
    %18 = arith.addf %15, %17 : vector<8x256xf32>
    %cst_12 = arith.constant 0.000000e+00 : f32
    %19 = vector.broadcast %cst_12 : f32 to vector<8x256xf32>
    %20 = arith.subf %19, %18 : vector<8x256xf32>
    %21 = math.exp %20 : vector<8x256xf32>
    %cst_13 = arith.constant 1.000000e+00 : f32
    %22 = vector.broadcast %cst_13 : f32 to vector<8x256xf32>
    %23 = arith.addf %22, %21 : vector<8x256xf32>
    %24 = arith.divf %18, %23 : vector<8x256xf32>
    %25 = arith.truncf %24 : vector<8x256xf32> to vector<8x256xbf16>
    %c0_14 = arith.constant 0 : index
    %c0_15 = arith.constant 0 : index
    %26 = vector.load %arg6[%c0_14, %c0_15] : memref<256x128xbf16, #tpu.memory_space<vmem>>, vector<256x128xbf16>
    %cst_16 = arith.constant dense<0.000000e+00> : vector<8x128xf32>
    %27 = tpu.matmul %25, %26, %cst_16 {dimension_numbers = #tpu.dot_dimension_numbers<[1], [0], [0], [1], [0, 0, 1, 1], [], []>} : vector<8x256xbf16>, vector<256x128xbf16>, vector<8x128xf32> -> vector<8x128xf32>
    %c0_17 = arith.constant 0 : index
    %c0_18 = arith.constant 0 : index
    %28 = vector.load %arg7[%c0_17, %c0_18] : memref<1x128xf32, #tpu.memory_space<vmem>>, vector<1x128xf32>
    %29 = vector.broadcast %28 : vector<1x128xf32> to vector<8x128xf32>
    %30 = arith.addf %27, %29 : vector<8x128xf32>
    %c0_19 = arith.constant 0 : index
    %c0_20 = arith.constant 0 : index
    %31 = vector.load %arg8[%c0_19, %c0_20] : memref<8x128xf32, #tpu.memory_space<vmem>>, vector<8x128xf32>
    tpu.vector_store %arg8[%c0_19, %c0_20], %30 {strides = array<i32>} : memref<8x128xf32, #tpu.memory_space<vmem>>, vector<8x128xf32>,
    return
  }
  func.func @transform_0(%arg0: i32) -> (i32, i32) {
    %c0_i32 = arith.constant 0 : i32
    %c0_i32_0 = arith.constant 0 : i32
    return %arg0, %c0_i32 : i32, i32
  }
  func.func @transform_1(%arg0: i32) -> (i32, i32) {
    %c0_i32 = arith.constant 0 : i32
    %c0_i32_0 = arith.constant 0 : i32
    %c0_i32_1 = arith.constant 0 : i32
    return %c0_i32, %c0_i32_0 : i32, i32
  }
  func.func @transform_2(%arg0: i32) -> (i32, i32) {
    %c0_i32 = arith.constant 0 : i32
    %c0_i32_0 = arith.constant 0 : i32
    %c0_i32_1 = arith.constant 0 : i32
    return %c0_i32, %c0_i32_0 : i32, i32
  }
  func.func @transform_3(%arg0: i32) -> (i32, i32) {
    %c0_i32 = arith.constant 0 : i32
    %c0_i32_0 = arith.constant 0 : i32
    %c0_i32_1 = arith.constant 0 : i32
    return %c0_i32, %c0_i32_0 : i32, i32
  }
  func.func @transform_4(%arg0: i32) -> (i32, i32) {
    %c0_i32 = arith.constant 0 : i32
    %c0_i32_0 = arith.constant 0 : i32
    %c0_i32_1 = arith.constant 0 : i32
    return %c0_i32, %c0_i32_0 : i32, i32
  }
  func.func @transform_5(%arg0: i32) -> (i32, i32) {
    %c0_i32 = arith.constant 0 : i32
    %c0_i32_0 = arith.constant 0 : i32
    %c0_i32_1 = arith.constant 0 : i32
    return %c0_i32, %c0_i32_0 : i32, i32
  }
  func.func @transform_6(%arg0: i32) -> (i32, i32) {
    %c0_i32 = arith.constant 0 : i32
    %c0_i32_0 = arith.constant 0 : i32
    %c0_i32_1 = arith.constant 0 : i32
    return %c0_i32, %c0_i32_0 : i32, i32
  }
  func.func @transform_7(%arg0: i32) -> (i32, i32) {
    %c0_i32 = arith.constant 0 : i32
    %c0_i32_0 = arith.constant 0 : i32
    return %arg0, %c0_i32 : i32, i32
  }
}

</mosaic_0001>

<llo_original>
// kernel: _forward_impl.1
$region0: #{_forward_impl.1}
  #allocation0 [shape = 'u32[]', space=smem, size = 0x4, offset = 0x4, fixed_abs, tag = 'smem constant byte address 0x4 - core index']
  #allocation1 [shape = 'u32[144,128]{1,0:T(1,128)}', space=vmem, size = 0x12000, scoped, tag = 'internal scratch']
  %s0 = inlined_call_operand.vmem [shape: f32[8,1024], index: 0, kind: input, shape index: {}]
  %s1 = inlined_call_operand.vmem [shape: bf16[1024,256], index: 1, kind: input, shape index: {}]
  %s2 = inlined_call_operand.vmem [shape: f32[1,256], index: 2, kind: input, shape index: {}]
  %s3 = inlined_call_operand.vmem [shape: bf16[256,256], index: 3, kind: input, shape index: {}]
  %s4 = inlined_call_operand.vmem [shape: f32[1,256], index: 4, kind: input, shape index: {}]
  %s5 = inlined_call_operand.vmem [shape: bf16[256,128], index: 5, kind: input, shape index: {}]
  %s6 = inlined_call_operand.vmem [shape: f32[1,128], index: 6, kind: input, shape index: {}]
  %s7 = inlined_call_operand.vmem [shape: f32[8,128], index: 7, kind: output, shape index: {}]
  %s8 = sld [smem:[#allocation0]]
  $region38: #{_forward_impl.1} parent=0
    _
  %s10 = ssub.s32 1, %s8
  %s11 = scalar_select 0, %s10, %s8
  // Predicated region
  $region2: #{_forward_impl.1} parent=0 // pred_check
    _
  $region3: #{_forward_impl.1} parent=0 // pred_check_branch
    %13 = sbr.rel (0) target = $region5
  $region4: #{_forward_impl.1} parent=0 // pred_region
    _
  $region5: #{_forward_impl.1} parent=0 // pred_fallthru
    _
  // Predicated region
  $region6: #{_forward_impl.1} parent=0 // pred_check
    _
  $region7: #{_forward_impl.1} parent=0 // pred_check_branch
    %15 = sbr.rel (0) target = $region9
  $region8: #{_forward_impl.1} parent=0 // pred_region
    _
  $region9: #{_forward_impl.1} parent=0 // pred_fallthru
    _
  // Predicated region
  $region10: #{_forward_impl.1} parent=0 // pred_check
    _
  $region11: #{_forward_impl.1} parent=0 // pred_check_branch
    %17 = sbr.rel (0) target = $region13
  $region12: #{_forward_impl.1} parent=0 // pred_region
    _
  $region13: #{_forward_impl.1} parent=0 // pred_fallthru
    _
  // Predicated region
  $region14: #{_forward_impl.1} parent=0 // pred_check
    _
  $region15: #{_forward_impl.1} parent=0 // pred_check_branch
    %19 = sbr.rel (0) target = $region17
  $region16: #{_forward_impl.1} parent=0 // pred_region
    _
  $region17: #{_forward_impl.1} parent=0 // pred_fallthru
    _
  // Predicated region
  $region18: #{_forward_impl.1} parent=0 // pred_check
    _
  $region19: #{_forward_impl.1} parent=0 // pred_check_branch
    %21 = sbr.rel (0) target = $region21
  $region20: #{_forward_impl.1} parent=0 // pred_region
    _
  $region21: #{_forward_impl.1} parent=0 // pred_fallthru
    _
  // Predicated region
  $region22: #{_forward_impl.1} parent=0 // pred_check
    _
  $region23: #{_forward_impl.1} parent=0 // pred_check_branch
    %23 = sbr.rel (0) target = $region25
  $region24: #{_forward_impl.1} parent=0 // pred_region
    _
  $region25: #{_forward_impl.1} parent=0 // pred_fallthru
    _
  // Predicated region
  $region26: #{_forward_impl.1} parent=0 // pred_check
    _
  $region27: #{_forward_impl.1} parent=0 // pred_check_branch
    %25 = sbr.rel (0) target = $region29
  $region28: #{_forward_impl.1} parent=0 // pred_region
    _
  $region29: #{_forward_impl.1} parent=0 // pred_fallthru
    _
  %v27 = vld [vmem:[%s0] sm:$0xff]
  %v28 = vld [vmem:[%s0 + $0x8] sm:$0xff]
  %v29 = vld [vmem:[%s0 + $0x10] sm:$0xff]
  %v30 = vld [vmem:[%s0 + $0x18] sm:$0xff]
  %v31 = vld [vmem:[%s0 + $0x20] sm:$0xff]
  %v32 = vld [vmem:[%s0 + $0x28] sm:$0xff]
  %v33 = vld [vmem:[%s0 + $0x30] sm:$0xff]
  %v34 = vld [vmem:[%s0 + $0x38] sm:$0xff]
  %v35 = vpack.c.bf16 %v27, %v27
  %v36 = vpack.c.bf16 %v28, %v28
  %v37 = vpack.c.bf16 %v29, %v29
  %v38 = vpack.c.bf16 %v30, %v30
  %v39 = vpack.c.bf16 %v31, %v31
  %v40 = vpack.c.bf16 %v32, %v32
  %v41 = vpack.c.bf16 %v33, %v33
  %v42 = vpack.c.bf16 %v34, %v34
  %v43 = vld [vmem:[%s1] sm:$0xff]
  %v44 = vld [vmem:[%s1 + $0x8] sm:$0xff]
  %v45 = vld [vmem:[%s1 + $0x10] sm:$0xff]
  %v46 = vld [vmem:[%s1 + $0x18] sm:$0xff]
  %v47 = vld [vmem:[%s1 + $0x20] sm:$0xff]
  %v48 = vld [vmem:[%s1 + $0x28] sm:$0xff]
  %v49 = vld [vmem:[%s1 + $0x30] sm:$0xff]
  %v50 = vld [vmem:[%s1 + $0x38] sm:$0xff]
  %v51 = vld [vmem:[%s1 + $0x40] sm:$0xff]
  %v52 = vld [vmem:[%s1 + $0x48] sm:$0xff]
  %v53 = vld [vmem:[%s1 + $0x50] sm:$0xff]
  %v54 = vld [vmem:[%s1 + $0x58] sm:$0xff]
  %v55 = vld [vmem:[%s1 + $0x60] sm:$0xff]
  %v56 = vld [vmem:[%s1 + $0x68] sm:$0xff]
  %v57 = vld [vmem:[%s1 + $0x70] sm:$0xff]
  %v58 = vld [vmem:[%s1 + $0x78] sm:$0xff]
  %v59 = vld [vmem:[%s1 + $0x80] sm:$0xff]
  %v60 = vld [vmem:[%s1 + $0x88] sm:$0xff]
  %v61 = vld [vmem:[%s1 + $0x90] sm:$0xff]
  %v62 = vld [vmem:[%s1 + $0x98] sm:$0xff]
  %v63 = vld [vmem:[%s1 + $0xa0] sm:$0xff]
  %v64 = vld [vmem:[%s1 + $0xa8] sm:$0xff]
  %v65 = vld [vmem:[%s1 + $0xb0] sm:$0xff]
  %v66 = vld [vmem:[%s1 + $0xb8] sm:$0xff]
  %v67 = vld [vmem:[%s1 + $0xc0] sm:$0xff]
  %v68 = vld [vmem:[%s1 + $0xc8] sm:$0xff]
  %v69 = vld [vmem:[%s1 + $0xd0] sm:$0xff]
  %v70 = vld [vmem:[%s1 + $0xd8] sm:$0xff]
  %v71 = vld [vmem:[%s1 + $0xe0] sm:$0xff]
  %v72 = vld [vmem:[%s1 + $0xe8] sm:$0xff]
  %v73 = vld [vmem:[%s1 + $0xf0] sm:$0xff]
  %v74 = vld [vmem:[%s1 + $0xf8] sm:$0xff]
  %v75 = vld [vmem:[%s1 + $0x100] sm:$0xff]
  %v76 = vld [vmem:[%s1 + $0x108] sm:$0xff]
  %v77 = vld [vmem:[%s1 + $0x110] sm:$0xff]
  %v78 = vld [vmem:[%s1 + $0x118] sm:$0xff]
  %v79 = vld [vmem:[%s1 + $0x120] sm:$0xff]
  %v80 = vld [vmem:[%s1 + $0x128] sm:$0xff]
  %v81 = vld [vmem:[%s1 + $0x130] sm:$0xff]
  %v82 = vld [vmem:[%s1 + $0x138] sm:$0xff]
  %v83 = vld [vmem:[%s1 + $0x140] sm:$0xff]
  %v84 = vld [vmem:[%s1 + $0x148] sm:$0xff]
  %v85 = vld [vmem:[%s1 + $0x150] sm:$0xff]
  %v86 = vld [vmem:[%s1 + $0x158] sm:$0xff]
  %v87 = vld [vmem:[%s1 + $0x160] sm:$0xff]
  %v88 = vld [vmem:[%s1 + $0x168] sm:$0xff]
  %v89 = vld [vmem:[%s1 + $0x170] sm:$0xff]
  %v90 = vld [vmem:[%s1 + $0x178] sm:$0xff]
  %v91 = vld [vmem:[%s1 + $0x180] sm:$0xff]
  %v92 = vld [vmem:[%s1 + $0x188] sm:$0xff]
  %v93 = vld [vmem:[%s1 + $0x190] sm:$0xff]
  %v94 = vld [vmem:[%s1 + $0x198] sm:$0xff]
  %v95 = vld [vmem:[%s1 + $0x1a0] sm:$0xff]
  %v96 = vld [vmem:[%s1 + $0x1a8] sm:$0xff]
  %v97 = vld [vmem:[%s1 + $0x1b0] sm:$0xff]
  %v98 = vld [vmem:[%s1 + $0x1b8] sm:$0xff]
  %v99 = vld [vmem:[%s1 + $0x1c0] sm:$0xff]
  %v100 = vld [vmem:[%s1 + $0x1c8] sm:$0xff]
  %v101 = vld [vmem:[%s1 + $0x1d0] sm:$0xff]
  %v102 = vld [vmem:[%s1 + $0x1d8] sm:$0xff]
  %v103 = vld [vmem:[%s1 + $0x1e0] sm:$0xff]
  %v104 = vld [vmem:[%s1 + $0x1e8] sm:$0xff]
  %v105 = vld [vmem:[%s1 + $0x1f0] sm:$0xff]
  %v106 = vld [vmem:[%s1 + $0x1f8] sm:$0xff]
  %v107 = vld [vmem:[%s1 + $0x200] sm:$0xff]
  %v108 = vld [vmem:[%s1 + $0x208] sm:$0xff]
  %v109 = vld [vmem:[%s1 + $0x210] sm:$0xff]
  %v110 = vld [vmem:[%s1 + $0x218] sm:$0xff]
  %v111 = vld [vmem:[%s1 + $0x220] sm:$0xff]
  %v112 = vld [vmem:[%s1 + $0x228] sm:$0xff]
  %v113 = vld [vmem:[%s1 + $0x230] sm:$0xff]
  %v114 = vld [vmem:[%s1 + $0x238] sm:$0xff]
  %v115 = vld [vmem:[%s1 + $0x240] sm:$0xff]
  %v116 = vld [vmem:[%s1 + $0x248] sm:$0xff]
  %v117 = vld [vmem:[%s1 + $0x250] sm:$0xff]
  %v118 = vld [vmem:[%s1 + $0x258] sm:$0xff]
  %v119 = vld [vmem:[%s1 + $0x260] sm:$0xff]
  %v120 = vld [vmem:[%s1 + $0x268] sm:$0xff]
  %v121 = vld [vmem:[%s1 + $0x270] sm:$0xff]
  %v122 = vld [vmem:[%s1 + $0x278] sm:$0xff]
  %v123 = vld [vmem:[%s1 + $0x280] sm:$0xff]
  %v124 = vld [vmem:[%s1 + $0x288] sm:$0xff]
  %v125 = vld [vmem:[%s1 + $0x290] sm:$0xff]
  %v126 = vld [vmem:[%s1 + $0x298] sm:$0xff]
  %v127 = vld [vmem:[%s1 + $0x2a0] sm:$0xff]
  %v128 = vld [vmem:[%s1 + $0x2a8] sm:$0xff]
  %v129 = vld [vmem:[%s1 + $0x2b0] sm:$0xff]
  %v130 = vld [vmem:[%s1 + $0x2b8] sm:$0xff]
  %v131 = vld [vmem:[%s1 + $0x2c0] sm:$0xff]
  %v132 = vld [vmem:[%s1 + $0x2c8] sm:$0xff]
  %v133 = vld [vmem:[%s1 + $0x2d0] sm:$0xff]
  %v134 = vld [vmem:[%s1 + $0x2d8] sm:$0xff]
  %v135 = vld [vmem:[%s1 + $0x2e0] sm:$0xff]
  %v136 = vld [vmem:[%s1 + $0x2e8] sm:$0xff]
  %v137 = vld [vmem:[%s1 + $0x2f0] sm:$0xff]
  %v138 = vld [vmem:[%s1 + $0x2f8] sm:$0xff]
  %v139 = vld [vmem:[%s1 + $0x300] sm:$0xff]
  %v140 = vld [vmem:[%s1 + $0x308] sm:$0xff]
  %v141 = vld [vmem:[%s1 + $0x310] sm:$0xff]
  %v142 = vld [vmem:[%s1 + $0x318] sm:$0xff]
  %v143 = vld [vmem:[%s1 + $0x320] sm:$0xff]
  %v144 = vld [vmem:[%s1 + $0x328] sm:$0xff]
  %v145 = vld [vmem:[%s1 + $0x330] sm:$0xff]
  %v146 = vld [vmem:[%s1 + $0x338] sm:$0xff]
  %v147 = vld [vmem:[%s1 + $0x340] sm:$0xff]
  %v148 = vld [vmem:[%s1 + $0x348] sm:$0xff]
  %v149 = vld [vmem:[%s1 + $0x350] sm:$0xff]
  %v150 = vld [vmem:[%s1 + $0x358] sm:$0xff]
  %v151 = vld [vmem:[%s1 + $0x360] sm:$0xff]
  %v152 = vld [vmem:[%s1 + $0x368] sm:$0xff]
  %v153 = vld [vmem:[%s1 + $0x370] sm:$0xff]
  %v154 = vld [vmem:[%s1 + $0x378] sm:$0xff]
  %v155 = vld [vmem:[%s1 + $0x380] sm:$0xff]
  %v156 = vld [vmem:[%s1 + $0x388] sm:$0xff]
  %v157 = vld [vmem:[%s1 + $0x390] sm:$0xff]
  %v158 = vld [vmem:[%s1 + $0x398] sm:$0xff]
  %v159 = vld [vmem:[%s1 + $0x3a0] sm:$0xff]
  %v160 = vld [vmem:[%s1 + $0x3a8] sm:$0xff]
  %v161 = vld [vmem:[%s1 + $0x3b0] sm:$0xff]
  %v162 = vld [vmem:[%s1 + $0x3b8] sm:$0xff]
  %v163 = vld [vmem:[%s1 + $0x3c0] sm:$0xff]
  %v164 = vld [vmem:[%s1 + $0x3c8] sm:$0xff]
  %v165 = vld [vmem:[%s1 + $0x3d0] sm:$0xff]
  %v166 = vld [vmem:[%s1 + $0x3d8] sm:$0xff]
  %v167 = vld [vmem:[%s1 + $0x3e0] sm:$0xff]
  %v168 = vld [vmem:[%s1 + $0x3e8] sm:$0xff]
  %v169 = vld [vmem:[%s1 + $0x3f0] sm:$0xff]
  %v170 = vld [vmem:[%s1 + $0x3f8] sm:$0xff]
  %v171 = vld [vmem:[%s2] sm:$0x3]
  %v173 = vlaneseq
  %v174 = vshrl.u32 %v173, 7
  %v175 = vsub.s32 0, %v174
  %v176 = vrot.slane %v171, %v175
  %v177 = vlaneseq
  %v178 = vshrl.u32 %v177, 7
  %v179 = vsub.s32 1, %v178
  %v180 = vrot.slane %v171, %v179
  %v311 = vunpack.c.l.b16 %v43
  %v312 = vunpack.c.h.b16 %v43
  %v313 = vunpack.c.l.b16 %v44
  %v314 = vunpack.c.h.b16 %v44
  %v315 = vunpack.c.l.b16 %v45
  %v316 = vunpack.c.h.b16 %v45
  %v317 = vunpack.c.l.b16 %v46
  %v318 = vunpack.c.h.b16 %v46
  %v319 = vunpack.c.l.b16 %v47
  %v320 = vunpack.c.h.b16 %v47
  %v321 = vunpack.c.l.b16 %v48
  %v322 = vunpack.c.h.b16 %v48
  %v323 = vunpack.c.l.b16 %v49
  %v324 = vunpack.c.h.b16 %v49
  %v325 = vunpack.c.l.b16 %v50
  %v326 = vunpack.c.h.b16 %v50
  %v327 = vunpack.c.l.b16 %v51
  %v328 = vunpack.c.h.b16 %v51
  %v329 = vunpack.c.l.b16 %v52
  %v330 = vunpack.c.h.b16 %v52
  %v331 = vunpack.c.l.b16 %v53
  %v332 = vunpack.c.h.b16 %v53
  %v333 = vunpack.c.l.b16 %v54
  %v334 = vunpack.c.h.b16 %v54
  %v335 = vunpack.c.l.b16 %v55
  %v336 = vunpack.c.h.b16 %v55
  %v337 = vunpack.c.l.b16 %v56
  %v338 = vunpack.c.h.b16 %v56
  %v339 = vunpack.c.l.b16 %v57
  %v340 = vunpack.c.h.b16 %v57
  %v341 = vunpack.c.l.b16 %v58
  %v342 = vunpack.c.h.b16 %v58
  %v343 = vunpack.c.l.b16 %v59
  %v344 = vunpack.c.h.b16 %v59
  %v345 = vunpack.c.l.b16 %v60
  %v346 = vunpack.c.h.b16 %v60
  %v347 = vunpack.c.l.b16 %v61
  %v348 = vunpack.c.h.b16 %v61
  %v349 = vunpack.c.l.b16 %v62
  %v350 = vunpack.c.h.b16 %v62
  %v351 = vunpack.c.l.b16 %v63
  %v352 = vunpack.c.h.b16 %v63
  %v353 = vunpack.c.l.b16 %v64
  %v354 = vunpack.c.h.b16 %v64
  %v355 = vunpack.c.l.b16 %v65
  %v356 = vunpack.c.h.b16 %v65
  %v357 = vunpack.c.l.b16 %v66
  %v358 = vunpack.c.h.b16 %v66
  %v359 = vunpack.c.l.b16 %v67
  %v360 = vunpack.c.h.b16 %v67
  %v361 = vunpack.c.l.b16 %v68
  %v362 = vunpack.c.h.b16 %v68
  %v363 = vunpack.c.l.b16 %v69
  %v364 = vunpack.c.h.b16 %v69
  %v365 = vunpack.c.l.b16 %v70
  %v366 = vunpack.c.h.b16 %v70
  %v367 = vunpack.c.l.b16 %v71
  %v368 = vunpack.c.h.b16 %v71
  %v369 = vunpack.c.l.b16 %v72
  %v370 = vunpack.c.h.b16 %v72
  %v371 = vunpack.c.l.b16 %v73
  %v372 = vunpack.c.h.b16 %v73
  %v373 = vunpack.c.l.b16 %v74
  %v374 = vunpack.c.h.b16 %v74
  %v375 = vunpack.c.l.b16 %v75
  %v376 = vunpack.c.h.b16 %v75
  %v377 = vunpack.c.l.b16 %v76
  %v378 = vunpack.c.h.b16 %v76
  %v379 = vunpack.c.l.b16 %v77
  %v380 = vunpack.c.h.b16 %v77
  %v381 = vunpack.c.l.b16 %v78
  %v382 = vunpack.c.h.b16 %v78
  %v383 = vunpack.c.l.b16 %v79
  %v384 = vunpack.c.h.b16 %v79
  %v385 = vunpack.c.l.b16 %v80
  %v386 = vunpack.c.h.b16 %v80
  %v387 = vunpack.c.l.b16 %v81
  %v388 = vunpack.c.h.b16 %v81
  %v389 = vunpack.c.l.b16 %v82
  %v390 = vunpack.c.h.b16 %v82
  %v391 = vunpack.c.l.b16 %v83
  %v392 = vunpack.c.h.b16 %v83
  %v393 = vunpack.c.l.b16 %v84
  %v394 = vunpack.c.h.b16 %v84
  %v395 = vunpack.c.l.b16 %v85
  %v396 = vunpack.c.h.b16 %v85
  %v397 = vunpack.c.l.b16 %v86
  %v398 = vunpack.c.h.b16 %v86
  %v399 = vunpack.c.l.b16 %v87
  %v400 = vunpack.c.h.b16 %v87
  %v401 = vunpack.c.l.b16 %v88
  %v402 = vunpack.c.h.b16 %v88
  %v403 = vunpack.c.l.b16 %v89
  %v404 = vunpack.c.h.b16 %v89
  %v405 = vunpack.c.l.b16 %v90
  %v406 = vunpack.c.h.b16 %v90
  %v407 = vunpack.c.l.b16 %v91
  %v408 = vunpack.c.h.b16 %v91
  %v409 = vunpack.c.l.b16 %v92
  %v410 = vunpack.c.h.b16 %v92
  %v411 = vunpack.c.l.b16 %v93
  %v412 = vunpack.c.h.b16 %v93
  %v413 = vunpack.c.l.b16 %v94
  %v414 = vunpack.c.h.b16 %v94
  %v415 = vunpack.c.l.b16 %v95
  %v416 = vunpack.c.h.b16 %v95
  %v417 = vunpack.c.l.b16 %v96
  %v418 = vunpack.c.h.b16 %v96
  %v419 = vunpack.c.l.b16 %v97
  %v420 = vunpack.c.h.b16 %v97
  %v421 = vunpack.c.l.b16 %v98
  %v422 = vunpack.c.h.b16 %v98
  %v423 = vunpack.c.l.b16 %v99
  %v424 = vunpack.c.h.b16 %v99
  %v425 = vunpack.c.l.b16 %v100
  %v426 = vunpack.c.h.b16 %v100
  %v427 = vunpack.c.l.b16 %v101
  %v428 = vunpack.c.h.b16 %v101
  %v429 = vunpack.c.l.b16 %v102
  %v430 = vunpack.c.h.b16 %v102
  %v431 = vunpack.c.l.b16 %v103
  %v432 = vunpack.c.h.b16 %v103
  %v433 = vunpack.c.l.b16 %v104
  %v434 = vunpack.c.h.b16 %v104
  %v435 = vunpack.c.l.b16 %v105
  %v436 = vunpack.c.h.b16 %v105
  %v437 = vunpack.c.l.b16 %v106
  %v438 = vunpack.c.h.b16 %v106
  %v439 = vunpack.c.l.b16 %v107
  %v440 = vunpack.c.h.b16 %v107
  %v441 = vunpack.c.l.b16 %v108
  %v442 = vunpack.c.h.b16 %v108
  %v443 = vunpack.c.l.b16 %v109
  %v444 = vunpack.c.h.b16 %v109
  %v445 = vunpack.c.l.b16 %v110
  %v446 = vunpack.c.h.b16 %v110
  %v447 = vunpack.c.l.b16 %v111
  %v448 = vunpack.c.h.b16 %v111
  %v449 = vunpack.c.l.b16 %v112
  %v450 = vunpack.c.h.b16 %v112
  %v451 = vunpack.c.l.b16 %v113
  %v452 = vunpack.c.h.b16 %v113
  %v453 = vunpack.c.l.b16 %v114
  %v454 = vunpack.c.h.b16 %v114
  %v455 = vunpack.c.l.b16 %v115
  %v456 = vunpack.c.h.b16 %v115
  %v457 = vunpack.c.l.b16 %v116
  %v458 = vunpack.c.h.b16 %v116
  %v459 = vunpack.c.l.b16 %v117
  %v460 = vunpack.c.h.b16 %v117
  %v461 = vunpack.c.l.b16 %v118
  %v462 = vunpack.c.h.b16 %v118
  %v463 = vunpack.c.l.b16 %v119
  %v464 = vunpack.c.h.b16 %v119
  %v465 = vunpack.c.l.b16 %v120
  %v466 = vunpack.c.h.b16 %v120
  %v467 = vunpack.c.l.b16 %v121
  %v468 = vunpack.c.h.b16 %v121
  %v469 = vunpack.c.l.b16 %v122
  %v470 = vunpack.c.h.b16 %v122
  %v471 = vunpack.c.l.b16 %v123
  %v472 = vunpack.c.h.b16 %v123
  %v473 = vunpack.c.l.b16 %v124
  %v474 = vunpack.c.h.b16 %v124
  %v475 = vunpack.c.l.b16 %v125
  %v476 = vunpack.c.h.b16 %v125
  %v477 = vunpack.c.l.b16 %v126
  %v478 = vunpack.c.h.b16 %v126
  %v479 = vunpack.c.l.b16 %v127
  %v480 = vunpack.c.h.b16 %v127
  %v481 = vunpack.c.l.b16 %v128
  %v482 = vunpack.c.h.b16 %v128
  %v483 = vunpack.c.l.b16 %v129
  %v484 = vunpack.c.h.b16 %v129
  %v485 = vunpack.c.l.b16 %v130
  %v486 = vunpack.c.h.b16 %v130
  %v487 = vunpack.c.l.b16 %v131
  %v488 = vunpack.c.h.b16 %v131
  %v489 = vunpack.c.l.b16 %v132
  %v490 = vunpack.c.h.b16 %v132
  %v491 = vunpack.c.l.b16 %v133
  %v492 = vunpack.c.h.b16 %v133
  %v493 = vunpack.c.l.b16 %v134
  %v494 = vunpack.c.h.b16 %v134
  %v495 = vunpack.c.l.b16 %v135
  %v496 = vunpack.c.h.b16 %v135
  %v497 = vunpack.c.l.b16 %v136
  %v498 = vunpack.c.h.b16 %v136
  %v499 = vunpack.c.l.b16 %v137
  %v500 = vunpack.c.h.b16 %v137
  %v501 = vunpack.c.l.b16 %v138
  %v502 = vunpack.c.h.b16 %v138
  %v503 = vunpack.c.l.b16 %v139
  %v504 = vunpack.c.h.b16 %v139
  %v505 = vunpack.c.l.b16 %v140
  %v506 = vunpack.c.h.b16 %v140
  %v507 = vunpack.c.l.b16 %v141
  %v508 = vunpack.c.h.b16 %v141
  %v509 = vunpack.c.l.b16 %v142
  %v510 = vunpack.c.h.b16 %v142
  %v511 = vunpack.c.l.b16 %v143
  %v512 = vunpack.c.h.b16 %v143
  %v513 = vunpack.c.l.b16 %v144
  %v514 = vunpack.c.h.b16 %v144
  %v515 = vunpack.c.l.b16 %v145
  %v516 = vunpack.c.h.b16 %v145
  %v517 = vunpack.c.l.b16 %v146
  %v518 = vunpack.c.h.b16 %v146
  %v519 = vunpack.c.l.b16 %v147
  %v520 = vunpack.c.h.b16 %v147
  %v521 = vunpack.c.l.b16 %v148
  %v522 = vunpack.c.h.b16 %v148
  %v523 = vunpack.c.l.b16 %v149
  %v524 = vunpack.c.h.b16 %v149
  %v525 = vunpack.c.l.b16 %v150
  %v526 = vunpack.c.h.b16 %v150
  %v527 = vunpack.c.l.b16 %v151
  %v528 = vunpack.c.h.b16 %v151
  %v529 = vunpack.c.l.b16 %v152
  %v530 = vunpack.c.h.b16 %v152
  %v531 = vunpack.c.l.b16 %v153
  %v532 = vunpack.c.h.b16 %v153
  %v533 = vunpack.c.l.b16 %v154
  %v534 = vunpack.c.h.b16 %v154
  %v535 = vunpack.c.l.b16 %v155
  %v536 = vunpack.c.h.b16 %v155
  %v537 = vunpack.c.l.b16 %v156
  %v538 = vunpack.c.h.b16 %v156
  %v539 = vunpack.c.l.b16 %v157
  %v540 = vunpack.c.h.b16 %v157
  %v541 = vunpack.c.l.b16 %v158
  %v542 = vunpack.c.h.b16 %v158
  %v543 = vunpack.c.l.b16 %v159
  %v544 = vunpack.c.h.b16 %v159
  %v545 = vunpack.c.l.b16 %v160
  %v546 = vunpack.c.h.b16 %v160
  %v547 = vunpack.c.l.b16 %v161
  %v548 = vunpack.c.h.b16 %v161
  %v549 = vunpack.c.l.b16 %v162
  %v550 = vunpack.c.h.b16 %v162
  %v551 = vunpack.c.l.b16 %v163
  %v552 = vunpack.c.h.b16 %v163
  %v553 = vunpack.c.l.b16 %v164
  %v554 = vunpack.c.h.b16 %v164
  %v555 = vunpack.c.l.b16 %v165
  %v556 = vunpack.c.h.b16 %v165
  %v557 = vunpack.c.l.b16 %v166
  %v558 = vunpack.c.h.b16 %v166
  %v559 = vunpack.c.l.b16 %v167
  %v560 = vunpack.c.h.b16 %v167
  %v561 = vunpack.c.l.b16 %v168
  %v562 = vunpack.c.h.b16 %v168
  %v563 = vunpack.c.l.b16 %v169
  %v564 = vunpack.c.h.b16 %v169
  %v565 = vunpack.c.l.b16 %v170
  %v566 = vunpack.c.h.b16 %v170
  %v567 = vpack.c.b16 %v313, %v311
  %v568 = vpack.c.b16 %v314, %v312
  %v569 = vpack.c.b16 %v317, %v315
  %v570 = vpack.c.b16 %v318, %v316
  %v571 = vpack.c.b16 %v321, %v319
  %v572 = vpack.c.b16 %v322, %v320
  %v573 = vpack.c.b16 %v325, %v323
  %v574 = vpack.c.b16 %v326, %v324
  %v575 = vpack.c.b16 %v329, %v327
  %v576 = vpack.c.b16 %v330, %v328
  %v577 = vpack.c.b16 %v333, %v331
  %v578 = vpack.c.b16 %v334, %v332
  %v579 = vpack.c.b16 %v337, %v335
  %v580 = vpack.c.b16 %v338, %v336
  %v581 = vpack.c.b16 %v341, %v339
  %v582 = vpack.c.b16 %v342, %v340
  %v583 = vpack.c.b16 %v345, %v343
  %v584 = vpack.c.b16 %v346, %v344
  %v585 = vpack.c.b16 %v349, %v347
  %v586 = vpack.c.b16 %v350, %v348
  %v587 = vpack.c.b16 %v353, %v351
  %v588 = vpack.c.b16 %v354, %v352
  %v589 = vpack.c.b16 %v357, %v355
  %v590 = vpack.c.b16 %v358, %v356
  %v591 = vpack.c.b16 %v361, %v359
  %v592 = vpack.c.b16 %v362, %v360
  %v593 = vpack.c.b16 %v365, %v363
  %v594 = vpack.c.b16 %v366, %v364
  %v595 = vpack.c.b16 %v369, %v367
  %v596 = vpack.c.b16 %v370, %v368
  %v597 = vpack.c.b16 %v373, %v371
  %v598 = vpack.c.b16 %v374, %v372
  %v599 = vpack.c.b16 %v377, %v375
  %v600 = vpack.c.b16 %v378, %v376
  %v601 = vpack.c.b16 %v381, %v379
  %v602 = vpack.c.b16 %v382, %v380
  %v603 = vpack.c.b16 %v385, %v383
  %v604 = vpack.c.b16 %v386, %v384
  %v605 = vpack.c.b16 %v389, %v387
  %v606 = vpack.c.b16 %v390, %v388
  %v607 = vpack.c.b16 %v393, %v391
  %v608 = vpack.c.b16 %v394, %v392
  %v609 = vpack.c.b16 %v397, %v395
  %v610 = vpack.c.b16 %v398, %v396
  %v611 = vpack.c.b16 %v401, %v399
  %v612 = vpack.c.b16 %v402, %v400
  %v613 = vpack.c.b16 %v405, %v403
  %v614 = vpack.c.b16 %v406, %v404
  %v615 = vpack.c.b16 %v409, %v407
  %v616 = vpack.c.b16 %v410, %v408
  %v617 = vpack.c.b16 %v413, %v411
  %v618 = vpack.c.b16 %v414, %v412
  %v619 = vpack.c.b16 %v417, %v415
  %v620 = vpack.c.b16 %v418, %v416
  %v621 = vpack.c.b16 %v421, %v419
  %v622 = vpack.c.b16 %v422, %v420
  %v623 = vpack.c.b16 %v425, %v423
  %v624 = vpack.c.b16 %v426, %v424
  %v625 = vpack.c.b16 %v429, %v427
  %v626 = vpack.c.b16 %v430, %v428
  %v627 = vpack.c.b16 %v433, %v431
  %v628 = vpack.c.b16 %v434, %v432
  %v629 = vpack.c.b16 %v437, %v435
  %v630 = vpack.c.b16 %v438, %v436
  %v631 = vpack.c.b16 %v441, %v439
  %v632 = vpack.c.b16 %v442, %v440
  %v633 = vpack.c.b16 %v445, %v443
  %v634 = vpack.c.b16 %v446, %v444
  %v635 = vpack.c.b16 %v449, %v447
  %v636 = vpack.c.b16 %v450, %v448
  %v637 = vpack.c.b16 %v453, %v451
  %v638 = vpack.c.b16 %v454, %v452
  %v639 = vpack.c.b16 %v457, %v455
  %v640 = vpack.c.b16 %v458, %v456
  %v641 = vpack.c.b16 %v461, %v459
  %v642 = vpack.c.b16 %v462, %v460
  %v643 = vpack.c.b16 %v465, %v463
  %v644 = vpack.c.b16 %v466, %v464
  %v645 = vpack.c.b16 %v469, %v467
  %v646 = vpack.c.b16 %v470, %v468
  %v647 = vpack.c.b16 %v473, %v471
  %v648 = vpack.c.b16 %v474, %v472
  %v649 = vpack.c.b16 %v477, %v475
  %v650 = vpack.c.b16 %v478, %v476
  %v651 = vpack.c.b16 %v481, %v479
  %v652 = vpack.c.b16 %v482, %v480
  %v653 = vpack.c.b16 %v485, %v483
  %v654 = vpack.c.b16 %v486, %v484
  %v655 = vpack.c.b16 %v489, %v487
  %v656 = vpack.c.b16 %v490, %v488
  %v657 = vpack.c.b16 %v493, %v491
  %v658 = vpack.c.b16 %v494, %v492
  %v659 = vpack.c.b16 %v497, %v495
  %v660 = vpack.c.b16 %v498, %v496
  %v661 = vpack.c.b16 %v501, %v499
  %v662 = vpack.c.b16 %v502, %v500
  %v663 = vpack.c.b16 %v505, %v503
  %v664 = vpack.c.b16 %v506, %v504
  %v665 = vpack.c.b16 %v509, %v507
  %v666 = vpack.c.b16 %v510, %v508
  %v667 = vpack.c.b16 %v513, %v511
  %v668 = vpack.c.b16 %v514, %v512
  %v669 = vpack.c.b16 %v517, %v515
  %v670 = vpack.c.b16 %v518, %v516
  %v671 = vpack.c.b16 %v521, %v519
  %v672 = vpack.c.b16 %v522, %v520
  %v673 = vpack.c.b16 %v525, %v523
  %v674 = vpack.c.b16 %v526, %v524
  %v675 = vpack.c.b16 %v529, %v527
  %v676 = vpack.c.b16 %v530, %v528
  %v677 = vpack.c.b16 %v533, %v531
  %v678 = vpack.c.b16 %v534, %v532
  %v679 = vpack.c.b16 %v537, %v535
  %v680 = vpack.c.b16 %v538, %v536
  %v681 = vpack.c.b16 %v541, %v539
  %v682 = vpack.c.b16 %v542, %v540
  %v683 = vpack.c.b16 %v545, %v543
  %v684 = vpack.c.b16 %v546, %v544
  %v685 = vpack.c.b16 %v549, %v547
  %v686 = vpack.c.b16 %v550, %v548
  %v687 = vpack.c.b16 %v553, %v551
  %v688 = vpack.c.b16 %v554, %v552
  %v689 = vpack.c.b16 %v557, %v555
  %v690 = vpack.c.b16 %v558, %v556
  %v691 = vpack.c.b16 %v561, %v559
  %v692 = vpack.c.b16 %v562, %v560
  %v693 = vpack.c.b16 %v565, %v563
  %v694 = vpack.c.b16 %v566, %v564
  %823 = vmatprep.subr.bf16.mxu0 %v568
  %824 = vmatpush1.bf16.msra.mxu0 %v567
  %825 = vmatprep.subr.bf16.mxu0 %v570
  %826 = vmatpush1.bf16.msra.mxu0 %v569
  %827 = vmatprep.subr.bf16.mxu0 %v572
  %828 = vmatpush1.bf16.msra.mxu0 %v571
  %829 = vmatprep.subr.bf16.mxu0 %v574
  %830 = vmatpush1.bf16.msra.mxu0 %v573
  %831 = vmatprep.subr.bf16.mxu0 %v576
  %832 = vmatpush1.bf16.msra.mxu0 %v575
  %833 = vmatprep.subr.bf16.mxu0 %v578
  %834 = vmatpush1.bf16.msra.mxu0 %v577
  %835 = vmatprep.subr.bf16.mxu0 %v580
  %836 = vmatpush1.bf16.msra.mxu0 %v579
  %837 = vmatprep.subr.bf16.mxu0 %v582
  %838 = vmatpush1.bf16.msra.mxu0 %v581
  %839 = vmatprep.subr.bf16.mxu0 %v584
  %840 = vmatpush1.bf16.msra.mxu0 %v583
  %841 = vmatprep.subr.bf16.mxu0 %v586
  %842 = vmatpush1.bf16.msra.mxu0 %v585
  %843 = vmatprep.subr.bf16.mxu0 %v588
  %844 = vmatpush1.bf16.msra.mxu0 %v587
  %845 = vmatprep.subr.bf16.mxu0 %v590
  %846 = vmatpush1.bf16.msra.mxu0 %v589
  %847 = vmatprep.subr.bf16.mxu0 %v592
  %848 = vmatpush1.bf16.msra.mxu0 %v591
  %849 = vmatprep.subr.bf16.mxu0 %v594
  %850 = vmatpush1.bf16.msra.mxu0 %v593
  %851 = vmatprep.subr.bf16.mxu0 %v596
  %852 = vmatpush1.bf16.msra.mxu0 %v595
  %853 = vmatprep.subr.bf16.mxu0 %v598
  %854 = vmatpush1.bf16.msra.mxu0 %v597
  %855 = vmatprep.mubr.bf16.mxu0 %v36
  %856 = vmatmul.mubr.bf16.gmra.mrb[0].mxu0 %v35
  %v857 = vpop.f32.mrb[0].mxu0
  %v858 = vadd.f32 %v176, %v857
  %v859 = vpop.f32.mrb[0].mxu0
  %v860 = vadd.f32 %v180, %v859
  %v861 = vpop.f32.mrb[0].mxu0
  %v862 = vpop.f32.mrb[0].mxu0
  %863 = vdwg.mxu0
  %864 = vmatprep.subr.bf16.mxu0 %v600
  %865 = vmatpush1.bf16.msra.mxu0 %v599
  %866 = vmatprep.subr.bf16.mxu0 %v602
  %867 = vmatpush1.bf16.msra.mxu0 %v601
  %868 = vmatprep.subr.bf16.mxu0 %v604
  %869 = vmatpush1.bf16.msra.mxu0 %v603
  %870 = vmatprep.subr.bf16.mxu0 %v606
  %871 = vmatpush1.bf16.msra.mxu0 %v605
  %872 = vmatprep.subr.bf16.mxu0 %v608
  %873 = vmatpush1.bf16.msra.mxu0 %v607
  %874 = vmatprep.subr.bf16.mxu0 %v610
  %875 = vmatpush1.bf16.msra.mxu0 %v609
  %876 = vmatprep.subr.bf16.mxu0 %v612
  %877 = vmatpush1.bf16.msra.mxu0 %v611
  %878 = vmatprep.subr.bf16.mxu0 %v614
  %879 = vmatpush1.bf16.msra.mxu0 %v613
  %880 = vmatprep.subr.bf16.mxu0 %v616
  %881 = vmatpush1.bf16.msra.mxu0 %v615
  %882 = vmatprep.subr.bf16.mxu0 %v618
  %883 = vmatpush1.bf16.msra.mxu0 %v617
  %884 = vmatprep.subr.bf16.mxu0 %v620
  %885 = vmatpush1.bf16.msra.mxu0 %v619
  %886 = vmatprep.subr.bf16.mxu0 %v622
  %887 = vmatpush1.bf16.msra.mxu0 %v621
  %888 = vmatprep.subr.bf16.mxu0 %v624
  %889 = vmatpush1.bf16.msra.mxu0 %v623
  %890 = vmatprep.subr.bf16.mxu0 %v626
  %891 = vmatpush1.bf16.msra.mxu0 %v625
  %892 = vmatprep.subr.bf16.mxu0 %v628
  %893 = vmatpush1.bf16.msra.mxu0 %v627
  %894 = vmatprep.subr.bf16.mxu0 %v630
  %895 = vmatpush1.bf16.msra.mxu0 %v629
  %896 = vmatprep.mubr.bf16.mxu0 %v38
  %897 = vmatmul.mubr.bf16.gmra.mrb[0].mxu0 %v37
  %v898 = vpop.f32.mrb[0].mxu0
  %v899 = vadd.f32 %v858, %v898
  %v900 = vpop.f32.mrb[0].mxu0
  %v901 = vadd.f32 %v860, %v900
  %v902 = vpop.f32.mrb[0].mxu0
  %v903 = vpop.f32.mrb[0].mxu0
  %904 = vdwg.mxu0
  %905 = vmatprep.subr.bf16.mxu0 %v632
  %906 = vmatpush1.bf16.msra.mxu0 %v631
  %907 = vmatprep.subr.bf16.mxu0 %v634
  %908 = vmatpush1.bf16.msra.mxu0 %v633
  %909 = vmatprep.subr.bf16.mxu0 %v636
  %910 = vmatpush1.bf16.msra.mxu0 %v635
  %911 = vmatprep.subr.bf16.mxu0 %v638
  %912 = vmatpush1.bf16.msra.mxu0 %v637
  %913 = vmatprep.subr.bf16.mxu0 %v640
  %914 = vmatpush1.bf16.msra.mxu0 %v639
  %915 = vmatprep.subr.bf16.mxu0 %v642
  %916 = vmatpush1.bf16.msra.mxu0 %v641
  %917 = vmatprep.subr.bf16.mxu0 %v644
  %918 = vmatpush1.bf16.msra.mxu0 %v643
  %919 = vmatprep.subr.bf16.mxu0 %v646
  %920 = vmatpush1.bf16.msra.mxu0 %v645
  %921 = vmatprep.subr.bf16.mxu0 %v648
  %922 = vmatpush1.bf16.msra.mxu0 %v647
  %923 = vmatprep.subr.bf16.mxu0 %v650
  %924 = vmatpush1.bf16.msra.mxu0 %v649
  %925 = vmatprep.subr.bf16.mxu0 %v652
  %926 = vmatpush1.bf16.msra.mxu0 %v651
  %927 = vmatprep.subr.bf16.mxu0 %v654
  %928 = vmatpush1.bf16.msra.mxu0 %v653
  %929 = vmatprep.subr.bf16.mxu0 %v656
  %930 = vmatpush1.bf16.msra.mxu0 %v655
  %931 = vmatprep.subr.bf16.mxu0 %v658
  %932 = vmatpush1.bf16.msra.mxu0 %v657
  %933 = vmatprep.subr.bf16.mxu0 %v660
  %934 = vmatpush1.bf16.msra.mxu0 %v659
  %935 = vmatprep.subr.bf16.mxu0 %v662
  %936 = vmatpush1.bf16.msra.mxu0 %v661
  %937 = vmatprep.mubr.bf16.mxu0 %v40
  %938 = vmatmul.mubr.bf16.gmra.mrb[0].mxu0 %v39
  %v939 = vpop.f32.mrb[0].mxu0
  %v940 = vadd.f32 %v899, %v939
  %v941 = vpop.f32.mrb[0].mxu0
  %v942 = vadd.f32 %v901, %v941
  %v943 = vpop.f32.mrb[0].mxu0
  %v944 = vpop.f32.mrb[0].mxu0
  %945 = vdwg.mxu0
  %946 = vmatprep.subr.bf16.mxu0 %v664
  %947 = vmatpush1.bf16.msra.mxu0 %v663
  %948 = vmatprep.subr.bf16.mxu0 %v666
  %949 = vmatpush1.bf16.msra.mxu0 %v665
  %950 = vmatprep.subr.bf16.mxu0 %v668
  %951 = vmatpush1.bf16.msra.mxu0 %v667
  %952 = vmatprep.subr.bf16.mxu0 %v670
  %953 = vmatpush1.bf16.msra.mxu0 %v669
  %954 = vmatprep.subr.bf16.mxu0 %v672
  %955 = vmatpush1.bf16.msra.mxu0 %v671
  %956 = vmatprep.subr.bf16.mxu0 %v674
  %957 = vmatpush1.bf16.msra.mxu0 %v673
  %958 = vmatprep.subr.bf16.mxu0 %v676
  %959 = vmatpush1.bf16.msra.mxu0 %v675
  %960 = vmatprep.subr.bf16.mxu0 %v678
  %961 = vmatpush1.bf16.msra.mxu0 %v677
  %962 = vmatprep.subr.bf16.mxu0 %v680
  %963 = vmatpush1.bf16.msra.mxu0 %v679
  %964 = vmatprep.subr.bf16.mxu0 %v682
  %965 = vmatpush1.bf16.msra.mxu0 %v681
  %966 = vmatprep.subr.bf16.mxu0 %v684
  %967 = vmatpush1.bf16.msra.mxu0 %v683
  %968 = vmatprep.subr.bf16.mxu0 %v686
  %969 = vmatpush1.bf16.msra.mxu0 %v685
  %970 = vmatprep.subr.bf16.mxu0 %v688
  %971 = vmatpush1.bf16.msra.mxu0 %v687
  %972 = vmatprep.subr.bf16.mxu0 %v690
  %973 = vmatpush1.bf16.msra.mxu0 %v689
  %974 = vmatprep.subr.bf16.mxu0 %v692
  %975 = vmatpush1.bf16.msra.mxu0 %v691
  %976 = vmatprep.subr.bf16.mxu0 %v694
  %977 = vmatpush1.bf16.msra.mxu0 %v693
  %978 = vmatprep.mubr.bf16.mxu0 %v42
  %979 = vmatmul.mubr.bf16.gmra.mrb[0].mxu0 %v41
  %v980 = vpop.f32.mrb[0].mxu0
  %v981 = vadd.f32 %v940, %v980
  %v982 = vpop.f32.mrb[0].mxu0
  %v983 = vadd.f32 %v942, %v982
  %v984 = vpop.f32.mrb[0].mxu0
  %v985 = vpop.f32.mrb[0].mxu0
  %986 = vdwg.mxu0
  %v987 = vsub.f32 0.0, %v981
  %v988 = vsub.f32 0.0, %v983
  %v989 = vmul.f32 %v987, 1.442695
  %v990 = vpow.pop %v989
  %v991 = vmul.f32 %v988, 1.442695
  %v992 = vpow.pop %v991
  %v993 = vadd.f32 %v990, 1.0
  %v994 = vadd.f32 %v992, 1.0
  %v995 = vrcp.pop %v993
  %v996 = vmul.f32 %v981, %v995
  %v997 = vrcp.pop %v994
  %v998 = vmul.f32 %v983, %v997
  %v999 = vpack.c.bf16 %v996, %v996
  %v1000 = vpack.c.bf16 %v998, %v998
  %v1001 = vld [vmem:[%s3] sm:$0xff]
  %v1002 = vld [vmem:[%s3 + $0x8] sm:$0xff]
  %v1003 = vld [vmem:[%s3 + $0x10] sm:$0xff]
  %v1004 = vld [vmem:[%s3 + $0x18] sm:$0xff]
  %v1005 = vld [vmem:[%s3 + $0x20] sm:$0xff]
  %v1006 = vld [vmem:[%s3 + $0x28] sm:$0xff]
  %v1007 = vld [vmem:[%s3 + $0x30] sm:$0xff]
  %v1008 = vld [vmem:[%s3 + $0x38] sm:$0xff]
  %v1009 = vld [vmem:[%s3 + $0x40] sm:$0xff]
  %v1010 = vld [vmem:[%s3 + $0x48] sm:$0xff]
  %v1011 = vld [vmem:[%s3 + $0x50] sm:$0xff]
  %v1012 = vld [vmem:[%s3 + $0x58] sm:$0xff]
  %v1013 = vld [vmem:[%s3 + $0x60] sm:$0xff]
  %v1014 = vld [vmem:[%s3 + $0x68] sm:$0xff]
  %v1015 = vld [vmem:[%s3 + $0x70] sm:$0xff]
  %v1016 = vld [vmem:[%s3 + $0x78] sm:$0xff]
  %v1017 = vld [vmem:[%s3 + $0x80] sm:$0xff]
  %v1018 = vld [vmem:[%s3 + $0x88] sm:$0xff]
  %v1019 = vld [vmem:[%s3 + $0x90] sm:$0xff]
  %v1020 = vld [vmem:[%s3 + $0x98] sm:$0xff]
  %v1021 = vld [vmem:[%s3 + $0xa0] sm:$0xff]
  %v1022 = vld [vmem:[%s3 + $0xa8] sm:$0xff]
  %v1023 = vld [vmem:[%s3 + $0xb0] sm:$0xff]
  %v1024 = vld [vmem:[%s3 + $0xb8] sm:$0xff]
  %v1025 = vld [vmem:[%s3 + $0xc0] sm:$0xff]
  %v1026 = vld [vmem:[%s3 + $0xc8] sm:$0xff]
  %v1027 = vld [vmem:[%s3 + $0xd0] sm:$0xff]
  %v1028 = vld [vmem:[%s3 + $0xd8] sm:$0xff]
  %v1029 = vld [vmem:[%s3 + $0xe0] sm:$0xff]
  %v1030 = vld [vmem:[%s3 + $0xe8] sm:$0xff]
  %v1031 = vld [vmem:[%s3 + $0xf0] sm:$0xff]
  %v1032 = vld [vmem:[%s3 + $0xf8] sm:$0xff]
  %v1033 = vld [vmem:[%s4] sm:$0x3]
  %v1035 = vlaneseq
  %v1036 = vshrl.u32 %v1035, 7
  %v1037 = vsub.s32 0, %v1036
  %v1038 = vrot.slane %v1033, %v1037
  %v1039 = vlaneseq
  %v1040 = vshrl.u32 %v1039, 7
  %v1041 = vsub.s32 1, %v1040
  %v1042 = vrot.slane %v1033, %v1041
  %v1077 = vunpack.c.l.b16 %v1001
  %v1078 = vunpack.c.h.b16 %v1001
  %v1079 = vunpack.c.l.b16 %v1002
  %v1080 = vunpack.c.h.b16 %v1002
  %v1081 = vunpack.c.l.b16 %v1003
  %v1082 = vunpack.c.h.b16 %v1003
  %v1083 = vunpack.c.l.b16 %v1004
  %v1084 = vunpack.c.h.b16 %v1004
  %v1085 = vunpack.c.l.b16 %v1005
  %v1086 = vunpack.c.h.b16 %v1005
  %v1087 = vunpack.c.l.b16 %v1006
  %v1088 = vunpack.c.h.b16 %v1006
  %v1089 = vunpack.c.l.b16 %v1007
  %v1090 = vunpack.c.h.b16 %v1007
  %v1091 = vunpack.c.l.b16 %v1008
  %v1092 = vunpack.c.h.b16 %v1008
  %v1093 = vunpack.c.l.b16 %v1009
  %v1094 = vunpack.c.h.b16 %v1009
  %v1095 = vunpack.c.l.b16 %v1010
  %v1096 = vunpack.c.h.b16 %v1010
  %v1097 = vunpack.c.l.b16 %v1011
  %v1098 = vunpack.c.h.b16 %v1011
  %v1099 = vunpack.c.l.b16 %v1012
  %v1100 = vunpack.c.h.b16 %v1012
  %v1101 = vunpack.c.l.b16 %v1013
  %v1102 = vunpack.c.h.b16 %v1013
  %v1103 = vunpack.c.l.b16 %v1014
  %v1104 = vunpack.c.h.b16 %v1014
  %v1105 = vunpack.c.l.b16 %v1015
  %v1106 = vunpack.c.h.b16 %v1015
  %v1107 = vunpack.c.l.b16 %v1016
  %v1108 = vunpack.c.h.b16 %v1016
  %v1109 = vunpack.c.l.b16 %v1017
  %v1110 = vunpack.c.h.b16 %v1017
  %v1111 = vunpack.c.l.b16 %v1018
  %v1112 = vunpack.c.h.b16 %v1018
  %v1113 = vunpack.c.l.b16 %v1019
  %v1114 = vunpack.c.h.b16 %v1019
  %v1115 = vunpack.c.l.b16 %v1020
  %v1116 = vunpack.c.h.b16 %v1020
  %v1117 = vunpack.c.l.b16 %v1021
  %v1118 = vunpack.c.h.b16 %v1021
  %v1119 = vunpack.c.l.b16 %v1022
  %v1120 = vunpack.c.h.b16 %v1022
  %v1121 = vunpack.c.l.b16 %v1023
  %v1122 = vunpack.c.h.b16 %v1023
  %v1123 = vunpack.c.l.b16 %v1024
  %v1124 = vunpack.c.h.b16 %v1024
  %v1125 = vunpack.c.l.b16 %v1025
  %v1126 = vunpack.c.h.b16 %v1025
  %v1127 = vunpack.c.l.b16 %v1026
  %v1128 = vunpack.c.h.b16 %v1026
  %v1129 = vunpack.c.l.b16 %v1027
  %v1130 = vunpack.c.h.b16 %v1027
  %v1131 = vunpack.c.l.b16 %v1028
  %v1132 = vunpack.c.h.b16 %v1028
  %v1133 = vunpack.c.l.b16 %v1029
  %v1134 = vunpack.c.h.b16 %v1029
  %v1135 = vunpack.c.l.b16 %v1030
  %v1136 = vunpack.c.h.b16 %v1030
  %v1137 = vunpack.c.l.b16 %v1031
  %v1138 = vunpack.c.h.b16 %v1031
  %v1139 = vunpack.c.l.b16 %v1032
  %v1140 = vunpack.c.h.b16 %v1032
  %v1141 = vpack.c.b16 %v1079, %v1077
  %v1142 = vpack.c.b16 %v1080, %v1078
  %v1143 = vpack.c.b16 %v1083, %v1081
  %v1144 = vpack.c.b16 %v1084, %v1082
  %v1145 = vpack.c.b16 %v1087, %v1085
  %v1146 = vpack.c.b16 %v1088, %v1086
  %v1147 = vpack.c.b16 %v1091, %v1089
  %v1148 = vpack.c.b16 %v1092, %v1090
  %v1149 = vpack.c.b16 %v1095, %v1093
  %v1150 = vpack.c.b16 %v1096, %v1094
  %v1151 = vpack.c.b16 %v1099, %v1097
  %v1152 = vpack.c.b16 %v1100, %v1098
  %v1153 = vpack.c.b16 %v1103, %v1101
  %v1154 = vpack.c.b16 %v1104, %v1102
  %v1155 = vpack.c.b16 %v1107, %v1105
  %v1156 = vpack.c.b16 %v1108, %v1106
  %v1157 = vpack.c.b16 %v1111, %v1109
  %v1158 = vpack.c.b16 %v1112, %v1110
  %v1159 = vpack.c.b16 %v1115, %v1113
  %v1160 = vpack.c.b16 %v1116, %v1114
  %v1161 = vpack.c.b16 %v1119, %v1117
  %v1162 = vpack.c.b16 %v1120, %v1118
  %v1163 = vpack.c.b16 %v1123, %v1121
  %v1164 = vpack.c.b16 %v1124, %v1122
  %v1165 = vpack.c.b16 %v1127, %v1125
  %v1166 = vpack.c.b16 %v1128, %v1126
  %v1167 = vpack.c.b16 %v1131, %v1129
  %v1168 = vpack.c.b16 %v1132, %v1130
  %v1169 = vpack.c.b16 %v1135, %v1133
  %v1170 = vpack.c.b16 %v1136, %v1134
  %v1171 = vpack.c.b16 %v1139, %v1137
  %v1172 = vpack.c.b16 %v1140, %v1138
  %1205 = vmatprep.subr.bf16.mxu0 %v1142
  %1206 = vmatpush1.bf16.msra.mxu0 %v1141
  %1207 = vmatprep.subr.bf16.mxu0 %v1144
  %1208 = vmatpush1.bf16.msra.mxu0 %v1143
  %1209 = vmatprep.subr.bf16.mxu0 %v1146
  %1210 = vmatpush1.bf16.msra.mxu0 %v1145
  %1211 = vmatprep.subr.bf16.mxu0 %v1148
  %1212 = vmatpush1.bf16.msra.mxu0 %v1147
  %1213 = vmatprep.subr.bf16.mxu0 %v1150
  %1214 = vmatpush1.bf16.msra.mxu0 %v1149
  %1215 = vmatprep.subr.bf16.mxu0 %v1152
  %1216 = vmatpush1.bf16.msra.mxu0 %v1151
  %1217 = vmatprep.subr.bf16.mxu0 %v1154
  %1218 = vmatpush1.bf16.msra.mxu0 %v1153
  %1219 = vmatprep.subr.bf16.mxu0 %v1156
  %1220 = vmatpush1.bf16.msra.mxu0 %v1155
  %1221 = vmatprep.subr.bf16.mxu0 %v1158
  %1222 = vmatpush1.bf16.msra.mxu0 %v1157
  %1223 = vmatprep.subr.bf16.mxu0 %v1160
  %1224 = vmatpush1.bf16.msra.mxu0 %v1159
  %1225 = vmatprep.subr.bf16.mxu0 %v1162
  %1226 = vmatpush1.bf16.msra.mxu0 %v1161
  %1227 = vmatprep.subr.bf16.mxu0 %v1164
  %1228 = vmatpush1.bf16.msra.mxu0 %v1163
  %1229 = vmatprep.subr.bf16.mxu0 %v1166
  %1230 = vmatpush1.bf16.msra.mxu0 %v1165
  %1231 = vmatprep.subr.bf16.mxu0 %v1168
  %1232 = vmatpush1.bf16.msra.mxu0 %v1167
  %1233 = vmatprep.subr.bf16.mxu0 %v1170
  %1234 = vmatpush1.bf16.msra.mxu0 %v1169
  %1235 = vmatprep.subr.bf16.mxu0 %v1172
  %1236 = vmatpush1.bf16.msra.mxu0 %v1171
  %1237 = vmatprep.mubr.bf16.mxu0 %v1000
  %1238 = vmatmul.mubr.bf16.gmra.mrb[0].mxu0 %v999
  %v1239 = vpop.f32.mrb[0].mxu0
  %v1240 = vadd.f32 %v1038, %v1239
  %v1241 = vpop.f32.mrb[0].mxu0
  %v1242 = vadd.f32 %v1042, %v1241
  %v1243 = vpop.f32.mrb[0].mxu0
  %v1244 = vpop.f32.mrb[0].mxu0
  %1245 = vdwg.mxu0
  %v1246 = vsub.f32 0.0, %v1240
  %v1247 = vsub.f32 0.0, %v1242
  %v1248 = vmul.f32 %v1246, 1.442695
  %v1249 = vpow.pop %v1248
  %v1250 = vmul.f32 %v1247, 1.442695
  %v1251 = vpow.pop %v1250
  %v1252 = vadd.f32 %v1249, 1.0
  %v1253 = vadd.f32 %v1251, 1.0
  %v1254 = vrcp.pop %v1252
  %v1255 = vmul.f32 %v1240, %v1254
  %v1256 = vrcp.pop %v1253
  %v1257 = vmul.f32 %v1242, %v1256
  %v1258 = vpack.c.bf16 %v1255, %v1255
  %v1259 = vpack.c.bf16 %v1257, %v1257
  %v1260 = vld [vmem:[%s5] sm:$0xf]
  %v1261 = vld [vmem:[%s5 + $0x4] sm:$0xf]
  %v1262 = vld [vmem:[%s5 + $0x8] sm:$0xf]
  %v1263 = vld [vmem:[%s5 + $0xc] sm:$0xf]
  %v1264 = vld [vmem:[%s5 + $0x10] sm:$0xf]
  %v1265 = vld [vmem:[%s5 + $0x14] sm:$0xf]
  %v1266 = vld [vmem:[%s5 + $0x18] sm:$0xf]
  %v1267 = vld [vmem:[%s5 + $0x1c] sm:$0xf]
  %v1268 = vld [vmem:[%s5 + $0x20] sm:$0xf]
  %v1269 = vld [vmem:[%s5 + $0x24] sm:$0xf]
  %v1270 = vld [vmem:[%s5 + $0x28] sm:$0xf]
  %v1271 = vld [vmem:[%s5 + $0x2c] sm:$0xf]
  %v1272 = vld [vmem:[%s5 + $0x30] sm:$0xf]
  %v1273 = vld [vmem:[%s5 + $0x34] sm:$0xf]
  %v1274 = vld [vmem:[%s5 + $0x38] sm:$0xf]
  %v1275 = vld [vmem:[%s5 + $0x3c] sm:$0xf]
  %v1276 = vld [vmem:[%s5 + $0x40] sm:$0xf]
  %v1277 = vld [vmem:[%s5 + $0x44] sm:$0xf]
  %v1278 = vld [vmem:[%s5 + $0x48] sm:$0xf]
  %v1279 = vld [vmem:[%s5 + $0x4c] sm:$0xf]
  %v1280 = vld [vmem:[%s5 + $0x50] sm:$0xf]
  %v1281 = vld [vmem:[%s5 + $0x54] sm:$0xf]
  %v1282 = vld [vmem:[%s5 + $0x58] sm:$0xf]
  %v1283 = vld [vmem:[%s5 + $0x5c] sm:$0xf]
  %v1284 = vld [vmem:[%s5 + $0x60] sm:$0xf]
  %v1285 = vld [vmem:[%s5 + $0x64] sm:$0xf]
  %v1286 = vld [vmem:[%s5 + $0x68] sm:$0xf]
  %v1287 = vld [vmem:[%s5 + $0x6c] sm:$0xf]
  %v1288 = vld [vmem:[%s5 + $0x70] sm:$0xf]
  %v1289 = vld [vmem:[%s5 + $0x74] sm:$0xf]
  %v1290 = vld [vmem:[%s5 + $0x78] sm:$0xf]
  %v1291 = vld [vmem:[%s5 + $0x7c] sm:$0xf]
  %v1292 = vld [vmem:[%s6] sm:$0x1]
  %v1294 = vlaneseq
  %v1295 = vshrl.u32 %v1294, 7
  %v1296 = vsub.s32 0, %v1295
  %v1297 = vrot.slane %v1292, %v1296
  %v1331 = vunpack.c.l.b16 %v1260
  %v1332 = vunpack.c.l.b16 %v1261
  %v1333 = vunpack.c.l.b16 %v1262
  %v1334 = vunpack.c.l.b16 %v1263
  %v1335 = vunpack.c.l.b16 %v1264
  %v1336 = vunpack.c.l.b16 %v1265
  %v1337 = vunpack.c.l.b16 %v1266
  %v1338 = vunpack.c.l.b16 %v1267
  %v1339 = vunpack.c.l.b16 %v1268
  %v1340 = vunpack.c.l.b16 %v1269
  %v1341 = vunpack.c.l.b16 %v1270
  %v1342 = vunpack.c.l.b16 %v1271
  %v1343 = vunpack.c.l.b16 %v1272
  %v1344 = vunpack.c.l.b16 %v1273
  %v1345 = vunpack.c.l.b16 %v1274
  %v1346 = vunpack.c.l.b16 %v1275
  %v1347 = vunpack.c.l.b16 %v1276
  %v1348 = vunpack.c.l.b16 %v1277
  %v1349 = vunpack.c.l.b16 %v1278
  %v1350 = vunpack.c.l.b16 %v1279
  %v1351 = vunpack.c.l.b16 %v1280
  %v1352 = vunpack.c.l.b16 %v1281
  %v1353 = vunpack.c.l.b16 %v1282
  %v1354 = vunpack.c.l.b16 %v1283
  %v1355 = vunpack.c.l.b16 %v1284
  %v1356 = vunpack.c.l.b16 %v1285
  %v1357 = vunpack.c.l.b16 %v1286
  %v1358 = vunpack.c.l.b16 %v1287
  %v1359 = vunpack.c.l.b16 %v1288
  %v1360 = vunpack.c.l.b16 %v1289
  %v1361 = vunpack.c.l.b16 %v1290
  %v1362 = vunpack.c.l.b16 %v1291
  %v1363 = vpack.c.b16 %v1332, %v1331
  %v1364 = vpack.c.b16 %v1334, %v1333
  %v1365 = vpack.c.b16 %v1336, %v1335
  %v1366 = vpack.c.b16 %v1338, %v1337
  %v1367 = vpack.c.b16 %v1340, %v1339
  %v1368 = vpack.c.b16 %v1342, %v1341
  %v1369 = vpack.c.b16 %v1344, %v1343
  %v1370 = vpack.c.b16 %v1346, %v1345
  %v1371 = vpack.c.b16 %v1348, %v1347
  %v1372 = vpack.c.b16 %v1350, %v1349
  %v1373 = vpack.c.b16 %v1352, %v1351
  %v1374 = vpack.c.b16 %v1354, %v1353
  %v1375 = vpack.c.b16 %v1356, %v1355
  %v1376 = vpack.c.b16 %v1358, %v1357
  %v1377 = vpack.c.b16 %v1360, %v1359
  %v1378 = vpack.c.b16 %v1362, %v1361
  %1395 = vmatprep.subr.bf16.mxu0 0
  %1396 = vmatpush1.bf16.msra.mxu0 %v1363
  %1397 = vmatprep.subr.bf16.mxu0 0
  %1398 = vmatpush1.bf16.msra.mxu0 %v1364
  %1399 = vmatprep.subr.bf16.mxu0 0
  %1400 = vmatpush1.bf16.msra.mxu0 %v1365
  %1401 = vmatprep.subr.bf16.mxu0 0
  %1402 = vmatpush1.bf16.msra.mxu0 %v1366
  %1403 = vmatprep.subr.bf16.mxu0 0
  %1404 = vmatpush1.bf16.msra.mxu0 %v1367
  %1405 = vmatprep.subr.bf16.mxu0 0
  %1406 = vmatpush1.bf16.msra.mxu0 %v1368
  %1407 = vmatprep.subr.bf16.mxu0 0
  %1408 = vmatpush1.bf16.msra.mxu0 %v1369
  %1409 = vmatprep.subr.bf16.mxu0 0
  %1410 = vmatpush1.bf16.msra.mxu0 %v1370
  %1411 = vmatprep.subr.bf16.mxu0 0
  %1412 = vmatpush1.bf16.msra.mxu0 %v1371
  %1413 = vmatprep.subr.bf16.mxu0 0
  %1414 = vmatpush1.bf16.msra.mxu0 %v1372
  %1415 = vmatprep.subr.bf16.mxu0 0
  %1416 = vmatpush1.bf16.msra.mxu0 %v1373
  %1417 = vmatprep.subr.bf16.mxu0 0
  %1418 = vmatpush1.bf16.msra.mxu0 %v1374
  %1419 = vmatprep.subr.bf16.mxu0 0
  %1420 = vmatpush1.bf16.msra.mxu0 %v1375
  %1421 = vmatprep.subr.bf16.mxu0 0
  %1422 = vmatpush1.bf16.msra.mxu0 %v1376
  %1423 = vmatprep.subr.bf16.mxu0 0
  %1424 = vmatpush1.bf16.msra.mxu0 %v1377
  %1425 = vmatprep.subr.bf16.mxu0 0
  %1426 = vmatpush1.bf16.msra.mxu0 %v1378
  %1427 = vmatprep.mubr.bf16.mxu0 %v1259
  %1428 = vmatmul.mubr.bf16.gmra.mrb[0].mxu0 %v1258
  %v1429 = vpop.f32.mrb[0].mxu0
  %v1430 = vadd.f32 %v1297, %v1429
  %v1431 = vpop.f32.mrb[0].mxu0
  %v1432 = vpop.f32.mrb[0].mxu0
  %v1433 = vpop.f32.mrb[0].mxu0
  %1434 = vdwg.mxu0
  %1435 = vst [vmem:[%s7] sm:$0xff] %v1430
  // Predicated region
  $region30: #{_forward_impl.1} parent=0 // pred_check
    _
  $region31: #{_forward_impl.1} parent=0 // pred_check_branch
    %1437 = sbr.rel (0) target = $region33
  $region32: #{_forward_impl.1} parent=0 // pred_region
    _
  $region33: #{_forward_impl.1} parent=0 // pred_fallthru
    _
  // Predicated region
  $region34: #{_forward_impl.1} parent=0 // pred_check
    _
  $region35: #{_forward_impl.1} parent=0 // pred_check_branch
    %1439 = sbr.rel (0) target = $region37
  $region36: #{_forward_impl.1} parent=0 // pred_region
    _
  $region37: #{_forward_impl.1} parent=0 // pred_fallthru
    _

// kernel: _forward_impl.1
$region0: #{_forward_impl.1}
  #allocation0 [shape = 'u32[]', space=smem, size = 0x4, offset = 0x4, fixed_abs, tag = 'smem constant byte address 0x4 - core index']
  #allocation1 [shape = 'u32[144,128]{1,0:T(1,128)}', space=vmem, size = 0x12000, scoped, tag = 'internal scratch']
  %s0 = inlined_call_operand.vmem [shape: f32[8,1024], index: 0, kind: input, shape index: {}]
  %s1 = inlined_call_operand.vmem [shape: bf16[1024,256], index: 1, kind: input, shape index: {}]
  %s2 = inlined_call_operand.vmem [shape: f32[1,256], index: 2, kind: input, shape index: {}]
  %s3 = inlined_call_operand.vmem [shape: bf16[256,256], index: 3, kind: input, shape index: {}]
  %s4 = inlined_call_operand.vmem [shape: f32[1,256], index: 4, kind: input, shape index: {}]
  %s5 = inlined_call_operand.vmem [shape: bf16[256,128], index: 5, kind: input, shape index: {}]
  %s6 = inlined_call_operand.vmem [shape: f32[1,128], index: 6, kind: input, shape index: {}]
  %s7 = inlined_call_operand.vmem [shape: f32[8,128], index: 7, kind: output, shape index: {}]
  %s8 = sld [smem:[#allocation0]]
  $region38: #{_forward_impl.1} parent=0
    _
  %s10 = ssub.s32 1, %s8
  %s11 = scalar_select 0, %s10, %s8
  // Predicated region
  $region2: #{_forward_impl.1} parent=0 // pred_check
    _
  $region3: #{_forward_impl.1} parent=0 // pred_check_branch
    %13 = sbr.rel (0) target = $region5
  $region4: #{_forward_impl.1} parent=0 // pred_region
    _
  $region5: #{_forward_impl.1} parent=0 // pred_fallthru
    _
  // Predicated region
  $region6: #{_forward_impl.1} parent=0 // pred_check
    _
  $region7: #{_forward_impl.1} parent=0 // pred_check_branch
    %15 = sbr.rel (0) target = $region9
  $region8: #{_forward_impl.1} parent=0 // pred_region
    _
  $region9: #{_forward_impl.1} parent=0 // pred_fallthru
    _
  // Predicated region
  $region10: #{_forward_impl.1} parent=0 // pred_check
    _
  $region11: #{_forward_impl.1} parent=0 // pred_check_branch
    %17 = sbr.rel (0) target = $region13
  $region12: #{_forward_impl.1} parent=0 // pred_region
    _
  $region13: #{_forward_impl.1} parent=0 // pred_fallthru
    _
  // Predicated region
  $region14: #{_forward_impl.1} parent=0 // pred_check
    _
  $region15: #{_forward_impl.1} parent=0 // pred_check_branch
    %19 = sbr.rel (0) target = $region17
  $region16: #{_forward_impl.1} parent=0 // pred_region
    _
  $region17: #{_forward_impl.1} parent=0 // pred_fallthru
    _
  // Predicated region
  $region18: #{_forward_impl.1} parent=0 // pred_check
    _
  $region19: #{_forward_impl.1} parent=0 // pred_check_branch
    %21 = sbr.rel (0) target = $region21
  $region20: #{_forward_impl.1} parent=0 // pred_region
    _
  $region21: #{_forward_impl.1} parent=0 // pred_fallthru
    _
  // Predicated region
  $region22: #{_forward_impl.1} parent=0 // pred_check
    _
  $region23: #{_forward_impl.1} parent=0 // pred_check_branch
    %23 = sbr.rel (0) target = $region25
  $region24: #{_forward_impl.1} parent=0 // pred_region
    _
  $region25: #{_forward_impl.1} parent=0 // pred_fallthru
    _
  // Predicated region
  $region26: #{_forward_impl.1} parent=0 // pred_check
    _
  $region27: #{_forward_impl.1} parent=0 // pred_check_branch
    %25 = sbr.rel (0) target = $region29
  $region28: #{_forward_impl.1} parent=0 // pred_region
    _
  $region29: #{_forward_impl.1} parent=0 // pred_fallthru
    _
  %v27 = vld [vmem:[%s0] sm:$0xff]
  %v28 = vld [vmem:[%s0 + $0x8] sm:$0xff]
  %v29 = vld [vmem:[%s0 + $0x10] sm:$0xff]
  %v30 = vld [vmem:[%s0 + $0x18] sm:$0xff]
  %v31 = vld [vmem:[%s0 + $0x20] sm:$0xff]
  %v32 = vld [vmem:[%s0 + $0x28] sm:$0xff]
  %v33 = vld [vmem:[%s0 + $0x30] sm:$0xff]
  %v34 = vld [vmem:[%s0 + $0x38] sm:$0xff]
  %v35 = vpack.c.bf16 %v27, %v27
  %v36 = vpack.c.bf16 %v28, %v28
  %v37 = vpack.c.bf16 %v29, %v29
  %v38 = vpack.c.bf16 %v30, %v30
  %v39 = vpack.c.bf16 %v31, %v31
  %v40 = vpack.c.bf16 %v32, %v32
  %v41 = vpack.c.bf16 %v33, %v33
  %v42 = vpack.c.bf16 %v34, %v34
  %v43 = vld [vmem:[%s1] sm:$0xff]
  %v44 = vld [vmem:[%s1 + $0x8] sm:$0xff]
  %v45 = vld [vmem:[%s1 + $0x10] sm:$0xff]
  %v46 = vld [vmem:[%s1 + $0x18] sm:$0xff]
  %v47 = vld [vmem:[%s1 + $0x20] sm:$0xff]
  %v48 = vld [vmem:[%s1 + $0x28] sm:$0xff]
  %v49 = vld [vmem:[%s1 + $0x30] sm:$0xff]
  %v50 = vld [vmem:[%s1 + $0x38] sm:$0xff]
  %v51 = vld [vmem:[%s1 + $0x40] sm:$0xff]
  %v52 = vld [vmem:[%s1 + $0x48] sm:$0xff]
  %v53 = vld [vmem:[%s1 + $0x50] sm:$0xff]
  %v54 = vld [vmem:[%s1 + $0x58] sm:$0xff]
  %v55 = vld [vmem:[%s1 + $0x60] sm:$0xff]
  %v56 = vld [vmem:[%s1 + $0x68] sm:$0xff]
  %v57 = vld [vmem:[%s1 + $0x70] sm:$0xff]
  %v58 = vld [vmem:[%s1 + $0x78] sm:$0xff]
  %v59 = vld [vmem:[%s1 + $0x80] sm:$0xff]
  %v60 = vld [vmem:[%s1 + $0x88] sm:$0xff]
  %v61 = vld [vmem:[%s1 + $0x90] sm:$0xff]
  %v62 = vld [vmem:[%s1 + $0x98] sm:$0xff]
  %v63 = vld [vmem:[%s1 + $0xa0] sm:$0xff]
  %v64 = vld [vmem:[%s1 + $0xa8] sm:$0xff]
  %v65 = vld [vmem:[%s1 + $0xb0] sm:$0xff]
  %v66 = vld [vmem:[%s1 + $0xb8] sm:$0xff]
  %v67 = vld [vmem:[%s1 + $0xc0] sm:$0xff]
  %v68 = vld [vmem:[%s1 + $0xc8] sm:$0xff]
  %v69 = vld [vmem:[%s1 + $0xd0] sm:$0xff]
  %v70 = vld [vmem:[%s1 + $0xd8] sm:$0xff]
  %v71 = vld [vmem:[%s1 + $0xe0] sm:$0xff]
  %v72 = vld [vmem:[%s1 + $0xe8] sm:$0xff]
  %v73 = vld [vmem:[%s1 + $0xf0] sm:$0xff]
  %v74 = vld [vmem:[%s1 + $0xf8] sm:$0xff]
  %v75 = vld [vmem:[%s1 + $0x100] sm:$0xff]
  %v76 = vld [vmem:[%s1 + $0x108] sm:$0xff]
  %v77 = vld [vmem:[%s1 + $0x110] sm:$0xff]
  %v78 = vld [vmem:[%s1 + $0x118] sm:$0xff]
  %v79 = vld [vmem:[%s1 + $0x120] sm:$0xff]
  %v80 = vld [vmem:[%s1 + $0x128] sm:$0xff]
  %v81 = vld [vmem:[%s1 + $0x130] sm:$0xff]
  %v82 = vld [vmem:[%s1 + $0x138] sm:$0xff]
  %v83 = vld [vmem:[%s1 + $0x140] sm:$0xff]
  %v84 = vld [vmem:[%s1 + $0x148] sm:$0xff]
  %v85 = vld [vmem:[%s1 + $0x150] sm:$0xff]
  %v86 = vld [vmem:[%s1 + $0x158] sm:$0xff]
  %v87 = vld [vmem:[%s1 + $0x160] sm:$0xff]
  %v88 = vld [vmem:[%s1 + $0x168] sm:$0xff]
  %v89 = vld [vmem:[%s1 + $0x170] sm:$0xff]
  %v90 = vld [vmem:[%s1 + $0x178] sm:$0xff]
  %v91 = vld [vmem:[%s1 + $0x180] sm:$0xff]
  %v92 = vld [vmem:[%s1 + $0x188] sm:$0xff]
  %v93 = vld [vmem:[%s1 + $0x190] sm:$0xff]
  %v94 = vld [vmem:[%s1 + $0x198] sm:$0xff]
  %v95 = vld [vmem:[%s1 + $0x1a0] sm:$0xff]
  %v96 = vld [vmem:[%s1 + $0x1a8] sm:$0xff]
  %v97 = vld [vmem:[%s1 + $0x1b0] sm:$0xff]
  %v98 = vld [vmem:[%s1 + $0x1b8] sm:$0xff]
  %v99 = vld [vmem:[%s1 + $0x1c0] sm:$0xff]
  %v100 = vld [vmem:[%s1 + $0x1c8] sm:$0xff]
  %v101 = vld [vmem:[%s1 + $0x1d0] sm:$0xff]
  %v102 = vld [vmem:[%s1 + $0x1d8] sm:$0xff]
  %v103 = vld [vmem:[%s1 + $0x1e0] sm:$0xff]
  %v104 = vld [vmem:[%s1 + $0x1e8] sm:$0xff]
  %v105 = vld [vmem:[%s1 + $0x1f0] sm:$0xff]
  %v106 = vld [vmem:[%s1 + $0x1f8] sm:$0xff]
  %v107 = vld [vmem:[%s1 + $0x200] sm:$0xff]
  %v108 = vld [vmem:[%s1 + $0x208] sm:$0xff]
  %v109 = vld [vmem:[%s1 + $0x210] sm:$0xff]
  %v110 = vld [vmem:[%s1 + $0x218] sm:$0xff]
  %v111 = vld [vmem:[%s1 + $0x220] sm:$0xff]
  %v112 = vld [vmem:[%s1 + $0x228] sm:$0xff]
  %v113 = vld [vmem:[%s1 + $0x230] sm:$0xff]
  %v114 = vld [vmem:[%s1 + $0x238] sm:$0xff]
  %v115 = vld [vmem:[%s1 + $0x240] sm:$0xff]
  %v116 = vld [vmem:[%s1 + $0x248] sm:$0xff]
  %v117 = vld [vmem:[%s1 + $0x250] sm:$0xff]
  %v118 = vld [vmem:[%s1 + $0x258] sm:$0xff]
  %v119 = vld [vmem:[%s1 + $0x260] sm:$0xff]
  %v120 = vld [vmem:[%s1 + $0x268] sm:$0xff]
  %v121 = vld [vmem:[%s1 + $0x270] sm:$0xff]
  %v122 = vld [vmem:[%s1 + $0x278] sm:$0xff]
  %v123 = vld [vmem:[%s1 + $0x280] sm:$0xff]
  %v124 = vld [vmem:[%s1 + $0x288] sm:$0xff]
  %v125 = vld [vmem:[%s1 + $0x290] sm:$0xff]
  %v126 = vld [vmem:[%s1 + $0x298] sm:$0xff]
  %v127 = vld [vmem:[%s1 + $0x2a0] sm:$0xff]
  %v128 = vld [vmem:[%s1 + $0x2a8] sm:$0xff]
  %v129 = vld [vmem:[%s1 + $0x2b0] sm:$0xff]
  %v130 = vld [vmem:[%s1 + $0x2b8] sm:$0xff]
  %v131 = vld [vmem:[%s1 + $0x2c0] sm:$0xff]
  %v132 = vld [vmem:[%s1 + $0x2c8] sm:$0xff]
  %v133 = vld [vmem:[%s1 + $0x2d0] sm:$0xff]
  %v134 = vld [vmem:[%s1 + $0x2d8] sm:$0xff]
  %v135 = vld [vmem:[%s1 + $0x2e0] sm:$0xff]
  %v136 = vld [vmem:[%s1 + $0x2e8] sm:$0xff]
  %v137 = vld [vmem:[%s1 + $0x2f0] sm:$0xff]
  %v138 = vld [vmem:[%s1 + $0x2f8] sm:$0xff]
  %v139 = vld [vmem:[%s1 + $0x300] sm:$0xff]
  %v140 = vld [vmem:[%s1 + $0x308] sm:$0xff]
  %v141 = vld [vmem:[%s1 + $0x310] sm:$0xff]
  %v142 = vld [vmem:[%s1 + $0x318] sm:$0xff]
  %v143 = vld [vmem:[%s1 + $0x320] sm:$0xff]
  %v144 = vld [vmem:[%s1 + $0x328] sm:$0xff]
  %v145 = vld [vmem:[%s1 + $0x330] sm:$0xff]
  %v146 = vld [vmem:[%s1 + $0x338] sm:$0xff]
  %v147 = vld [vmem:[%s1 + $0x340] sm:$0xff]
  %v148 = vld [vmem:[%s1 + $0x348] sm:$0xff]
  %v149 = vld [vmem:[%s1 + $0x350] sm:$0xff]
  %v150 = vld [vmem:[%s1 + $0x358] sm:$0xff]
  %v151 = vld [vmem:[%s1 + $0x360] sm:$0xff]
  %v152 = vld [vmem:[%s1 + $0x368] sm:$0xff]
  %v153 = vld [vmem:[%s1 + $0x370] sm:$0xff]
  %v154 = vld [vmem:[%s1 + $0x378] sm:$0xff]
  %v155 = vld [vmem:[%s1 + $0x380] sm:$0xff]
  %v156 = vld [vmem:[%s1 + $0x388] sm:$0xff]
  %v157 = vld [vmem:[%s1 + $0x390] sm:$0xff]
  %v158 = vld [vmem:[%s1 + $0x398] sm:$0xff]
  %v159 = vld [vmem:[%s1 + $0x3a0] sm:$0xff]
  %v160 = vld [vmem:[%s1 + $0x3a8] sm:$0xff]
  %v161 = vld [vmem:[%s1 + $0x3b0] sm:$0xff]
  %v162 = vld [vmem:[%s1 + $0x3b8] sm:$0xff]
  %v163 = vld [vmem:[%s1 + $0x3c0] sm:$0xff]
  %v164 = vld [vmem:[%s1 + $0x3c8] sm:$0xff]
  %v165 = vld [vmem:[%s1 + $0x3d0] sm:$0xff]
  %v166 = vld [vmem:[%s1 + $0x3d8] sm:$0xff]
  %v167 = vld [vmem:[%s1 + $0x3e0] sm:$0xff]
  %v168 = vld [vmem:[%s1 + $0x3e8] sm:$0xff]
  %v169 = vld [vmem:[%s1 + $0x3f0] sm:$0xff]
  %v170 = vld [vmem:[%s1 + $0x3f8] sm:$0xff]
  %v171 = vld [vmem:[%s2] sm:$0x3]
  %v173 = vlaneseq
  %v174 = vshrl.u32 %v173, 7
  %v175 = vsub.s32 0, %v174
  %v176 = vrot.slane %v171, %v175
  %v177 = vlaneseq
  %v178 = vshrl.u32 %v177, 7
  %v179 = vsub.s32 1, %v178
  %v180 = vrot.slane %v171, %v179
  %v311 = vunpack.c.l.b16 %v43
  %v312 = vunpack.c.h.b16 %v43
  %v313 = vunpack.c.l.b16 %v44
  %v314 = vunpack.c.h.b16 %v44
  %v315 = vunpack.c.l.b16 %v45
  %v316 = vunpack.c.h.b16 %v45
  %v317 = vunpack.c.l.b16 %v46
  %v318 = vunpack.c.h.b16 %v46
  %v319 = vunpack.c.l.b16 %v47
  %v320 = vunpack.c.h.b16 %v47
  %v321 = vunpack.c.l.b16 %v48
  %v322 = vunpack.c.h.b16 %v48
  %v323 = vunpack.c.l.b16 %v49
  %v324 = vunpack.c.h.b16 %v49
  %v325 = vunpack.c.l.b16 %v50
  %v326 = vunpack.c.h.b16 %v50
  %v327 = vunpack.c.l.b16 %v51
  %v328 = vunpack.c.h.b16 %v51
  %v329 = vunpack.c.l.b16 %v52
  %v330 = vunpack.c.h.b16 %v52
  %v331 = vunpack.c.l.b16 %v53
  %v332 = vunpack.c.h.b16 %v53
  %v333 = vunpack.c.l.b16 %v54
  %v334 = vunpack.c.h.b16 %v54
  %v335 = vunpack.c.l.b16 %v55
  %v336 = vunpack.c.h.b16 %v55
  %v337 = vunpack.c.l.b16 %v56
  %v338 = vunpack.c.h.b16 %v56
  %v339 = vunpack.c.l.b16 %v57
  %v340 = vunpack.c.h.b16 %v57
  %v341 = vunpack.c.l.b16 %v58
  %v342 = vunpack.c.h.b16 %v58
  %v343 = vunpack.c.l.b16 %v59
  %v344 = vunpack.c.h.b16 %v59
  %v345 = vunpack.c.l.b16 %v60
  %v346 = vunpack.c.h.b16 %v60
  %v347 = vunpack.c.l.b16 %v61
  %v348 = vunpack.c.h.b16 %v61
  %v349 = vunpack.c.l.b16 %v62
  %v350 = vunpack.c.h.b16 %v62
  %v351 = vunpack.c.l.b16 %v63
  %v352 = vunpack.c.h.b16 %v63
  %v353 = vunpack.c.l.b16 %v64
  %v354 = vunpack.c.h.b16 %v64
  %v355 = vunpack.c.l.b16 %v65
  %v356 = vunpack.c.h.b16 %v65
  %v357 = vunpack.c.l.b16 %v66
  %v358 = vunpack.c.h.b16 %v66
  %v359 = vunpack.c.l.b16 %v67
  %v360 = vunpack.c.h.b16 %v67
  %v361 = vunpack.c.l.b16 %v68
  %v362 = vunpack.c.h.b16 %v68
  %v363 = vunpack.c.l.b16 %v69
  %v364 = vunpack.c.h.b16 %v69
  %v365 = vunpack.c.l.b16 %v70
  %v366 = vunpack.c.h.b16 %v70
  %v367 = vunpack.c.l.b16 %v71
  %v368 = vunpack.c.h.b16 %v71
  %v369 = vunpack.c.l.b16 %v72
  %v370 = vunpack.c.h.b16 %v72
  %v371 = vunpack.c.l.b16 %v73
  %v372 = vunpack.c.h.b16 %v73
  %v373 = vunpack.c.l.b16 %v74
  %v374 = vunpack.c.h.b16 %v74
  %v375 = vunpack.c.l.b16 %v75
  %v376 = vunpack.c.h.b16 %v75
  %v377 = vunpack.c.l.b16 %v76
  %v378 = vunpack.c.h.b16 %v76
  %v379 = vunpack.c.l.b16 %v77
  %v380 = vunpack.c.h.b16 %v77
  %v381 = vunpack.c.l.b16 %v78
  %v382 = vunpack.c.h.b16 %v78
  %v383 = vunpack.c.l.b16 %v79
  %v384 = vunpack.c.h.b16 %v79
  %v385 = vunpack.c.l.b16 %v80
  %v386 = vunpack.c.h.b16 %v80
  %v387 = vunpack.c.l.b16 %v81
  %v388 = vunpack.c.h.b16 %v81
  %v389 = vunpack.c.l.b16 %v82
  %v390 = vunpack.c.h.b16 %v82
  %v391 = vunpack.c.l.b16 %v83
  %v392 = vunpack.c.h.b16 %v83
  %v393 = vunpack.c.l.b16 %v84
  %v394 = vunpack.c.h.b16 %v84
  %v395 = vunpack.c.l.b16 %v85
  %v396 = vunpack.c.h.b16 %v85
  %v397 = vunpack.c.l.b16 %v86
  %v398 = vunpack.c.h.b16 %v86
  %v399 = vunpack.c.l.b16 %v87
  %v400 = vunpack.c.h.b16 %v87
  %v401 = vunpack.c.l.b16 %v88
  %v402 = vunpack.c.h.b16 %v88
  %v403 = vunpack.c.l.b16 %v89
  %v404 = vunpack.c.h.b16 %v89
  %v405 = vunpack.c.l.b16 %v90
  %v406 = vunpack.c.h.b16 %v90
  %v407 = vunpack.c.l.b16 %v91
  %v408 = vunpack.c.h.b16 %v91
  %v409 = vunpack.c.l.b16 %v92
  %v410 = vunpack.c.h.b16 %v92
  %v411 = vunpack.c.l.b16 %v93
  %v412 = vunpack.c.h.b16 %v93
  %v413 = vunpack.c.l.b16 %v94
  %v414 = vunpack.c.h.b16 %v94
  %v415 = vunpack.c.l.b16 %v95
  %v416 = vunpack.c.h.b16 %v95
  %v417 = vunpack.c.l.b16 %v96
  %v418 = vunpack.c.h.b16 %v96
  %v419 = vunpack.c.l.b16 %v97
  %v420 = vunpack.c.h.b16 %v97
  %v421 = vunpack.c.l.b16 %v98
  %v422 = vunpack.c.h.b16 %v98
  %v423 = vunpack.c.l.b16 %v99
  %v424 = vunpack.c.h.b16 %v99
  %v425 = vunpack.c.l.b16 %v100
  %v426 = vunpack.c.h.b16 %v100
  %v427 = vunpack.c.l.b16 %v101
  %v428 = vunpack.c.h.b16 %v101
  %v429 = vunpack.c.l.b16 %v102
  %v430 = vunpack.c.h.b16 %v102
  %v431 = vunpack.c.l.b16 %v103
  %v432 = vunpack.c.h.b16 %v103
  %v433 = vunpack.c.l.b16 %v104
  %v434 = vunpack.c.h.b16 %v104
  %v435 = vunpack.c.l.b16 %v105
  %v436 = vunpack.c.h.b16 %v105
  %v437 = vunpack.c.l.b16 %v106
  %v438 = vunpack.c.h.b16 %v106
  %v439 = vunpack.c.l.b16 %v107
  %v440 = vunpack.c.h.b16 %v107
  %v441 = vunpack.c.l.b16 %v108
  %v442 = vunpack.c.h.b16 %v108
  %v443 = vunpack.c.l.b16 %v109
  %v444 = vunpack.c.h.b16 %v109
  %v445 = vunpack.c.l.b16 %v110
  %v446 = vunpack.c.h.b16 %v110
  %v447 = vunpack.c.l.b16 %v111
  %v448 = vunpack.c.h.b16 %v111
  %v449 = vunpack.c.l.b16 %v112
  %v450 = vunpack.c.h.b16 %v112
  %v451 = vunpack.c.l.b16 %v113
  %v452 = vunpack.c.h.b16 %v113
  %v453 = vunpack.c.l.b16 %v114
  %v454 = vunpack.c.h.b16 %v114
  %v455 = vunpack.c.l.b16 %v115
  %v456 = vunpack.c.h.b16 %v115
  %v457 = vunpack.c.l.b16 %v116
  %v458 = vunpack.c.h.b16 %v116
  %v459 = vunpack.c.l.b16 %v117
  %v460 = vunpack.c.h.b16 %v117
  %v461 = vunpack.c.l.b16 %v118
  %v462 = vunpack.c.h.b16 %v118
  %v463 = vunpack.c.l.b16 %v119
  %v464 = vunpack.c.h.b16 %v119
  %v465 = vunpack.c.l.b16 %v120
  %v466 = vunpack.c.h.b16 %v120
  %v467 = vunpack.c.l.b16 %v121
  %v468 = vunpack.c.h.b16 %v121
  %v469 = vunpack.c.l.b16 %v122
  %v470 = vunpack.c.h.b16 %v122
  %v471 = vunpack.c.l.b16 %v123
  %v472 = vunpack.c.h.b16 %v123
  %v473 = vunpack.c.l.b16 %v124
  %v474 = vunpack.c.h.b16 %v124
  %v475 = vunpack.c.l.b16 %v125
  %v476 = vunpack.c.h.b16 %v125
  %v477 = vunpack.c.l.b16 %v126
  %v478 = vunpack.c.h.b16 %v126
  %v479 = vunpack.c.l.b16 %v127
  %v480 = vunpack.c.h.b16 %v127
  %v481 = vunpack.c.l.b16 %v128
  %v482 = vunpack.c.h.b16 %v128
  %v483 = vunpack.c.l.b16 %v129
  %v484 = vunpack.c.h.b16 %v129
  %v485 = vunpack.c.l.b16 %v130
  %v486 = vunpack.c.h.b16 %v130
  %v487 = vunpack.c.l.b16 %v131
  %v488 = vunpack.c.h.b16 %v131
  %v489 = vunpack.c.l.b16 %v132
  %v490 = vunpack.c.h.b16 %v132
  %v491 = vunpack.c.l.b16 %v133
  %v492 = vunpack.c.h.b16 %v133
  %v493 = vunpack.c.l.b16 %v134
  %v494 = vunpack.c.h.b16 %v134
  %v495 = vunpack.c.l.b16 %v135
  %v496 = vunpack.c.h.b16 %v135
  %v497 = vunpack.c.l.b16 %v136
  %v498 = vunpack.c.h.b16 %v136
  %v499 = vunpack.c.l.b16 %v137
  %v500 = vunpack.c.h.b16 %v137
  %v501 = vunpack.c.l.b16 %v138
  %v502 = vunpack.c.h.b16 %v138
  %v503 = vunpack.c.l.b16 %v139
  %v504 = vunpack.c.h.b16 %v139
  %v505 = vunpack.c.l.b16 %v140
  %v506 = vunpack.c.h.b16 %v140
  %v507 = vunpack.c.l.b16 %v141
  %v508 = vunpack.c.h.b16 %v141
  %v509 = vunpack.c.l.b16 %v142
  %v510 = vunpack.c.h.b16 %v142
  %v511 = vunpack.c.l.b16 %v143
  %v512 = vunpack.c.h.b16 %v143
  %v513 = vunpack.c.l.b16 %v144
  %v514 = vunpack.c.h.b16 %v144
  %v515 = vunpack.c.l.b16 %v145
  %v516 = vunpack.c.h.b16 %v145
  %v517 = vunpack.c.l.b16 %v146
  %v518 = vunpack.c.h.b16 %v146
  %v519 = vunpack.c.l.b16 %v147
  %v520 = vunpack.c.h.b16 %v147
  %v521 = vunpack.c.l.b16 %v148
  %v522 = vunpack.c.h.b16 %v148
  %v523 = vunpack.c.l.b16 %v149
  %v524 = vunpack.c.h.b16 %v149
  %v525 = vunpack.c.l.b16 %v150
  %v526 = vunpack.c.h.b16 %v150
  %v527 = vunpack.c.l.b16 %v151
  %v528 = vunpack.c.h.b16 %v151
  %v529 = vunpack.c.l.b16 %v152
  %v530 = vunpack.c.h.b16 %v152
  %v531 = vunpack.c.l.b16 %v153
  %v532 = vunpack.c.h.b16 %v153
  %v533 = vunpack.c.l.b16 %v154
  %v534 = vunpack.c.h.b16 %v154
  %v535 = vunpack.c.l.b16 %v155
  %v536 = vunpack.c.h.b16 %v155
  %v537 = vunpack.c.l.b16 %v156
  %v538 = vunpack.c.h.b16 %v156
  %v539 = vunpack.c.l.b16 %v157
  %v540 = vunpack.c.h.b16 %v157
  %v541 = vunpack.c.l.b16 %v158
  %v542 = vunpack.c.h.b16 %v158
  %v543 = vunpack.c.l.b16 %v159
  %v544 = vunpack.c.h.b16 %v159
  %v545 = vunpack.c.l.b16 %v160
  %v546 = vunpack.c.h.b16 %v160
  %v547 = vunpack.c.l.b16 %v161
  %v548 = vunpack.c.h.b16 %v161
  %v549 = vunpack.c.l.b16 %v162
  %v550 = vunpack.c.h.b16 %v162
  %v551 = vunpack.c.l.b16 %v163
  %v552 = vunpack.c.h.b16 %v163
  %v553 = vunpack.c.l.b16 %v164
  %v554 = vunpack.c.h.b16 %v164
  %v555 = vunpack.c.l.b16 %v165
  %v556 = vunpack.c.h.b16 %v165
  %v557 = vunpack.c.l.b16 %v166
  %v558 = vunpack.c.h.b16 %v166
  %v559 = vunpack.c.l.b16 %v167
  %v560 = vunpack.c.h.b16 %v167
  %v561 = vunpack.c.l.b16 %v168
  %v562 = vunpack.c.h.b16 %v168
  %v563 = vunpack.c.l.b16 %v169
  %v564 = vunpack.c.h.b16 %v169
  %v565 = vunpack.c.l.b16 %v170
  %v566 = vunpack.c.h.b16 %v170
  %v567 = vpack.c.b16 %v313, %v311
  %v568 = vpack.c.b16 %v314, %v312
  %v569 = vpack.c.b16 %v317, %v315
  %v570 = vpack.c.b16 %v318, %v316
  %v571 = vpack.c.b16 %v321, %v319
  %v572 = vpack.c.b16 %v322, %v320
  %v573 = vpack.c.b16 %v325, %v323
  %v574 = vpack.c.b16 %v326, %v324
  %v575 = vpack.c.b16 %v329, %v327
  %v576 = vpack.c.b16 %v330, %v328
  %v577 = vpack.c.b16 %v333, %v331
  %v578 = vpack.c.b16 %v334, %v332
  %v579 = vpack.c.b16 %v337, %v335
  %v580 = vpack.c.b16 %v338, %v336
  %v581 = vpack.c.b16 %v341, %v339
  %v582 = vpack.c.b16 %v342, %v340
  %v583 = vpack.c.b16 %v345, %v343
  %v584 = vpack.c.b16 %v346, %v344
  %v585 = vpack.c.b16 %v349, %v347
  %v586 = vpack.c.b16 %v350, %v348
  %v587 = vpack.c.b16 %v353, %v351
  %v588 = vpack.c.b16 %v354, %v352
  %v589 = vpack.c.b16 %v357, %v355
  %v590 = vpack.c.b16 %v358, %v356
  %v591 = vpack.c.b16 %v361, %v359
  %v592 = vpack.c.b16 %v362, %v360
  %v593 = vpack.c.b16 %v365, %v363
  %v594 = vpack.c.b16 %v366, %v364
  %v595 = vpack.c.b16 %v369, %v367
  %v596 = vpack.c.b16 %v370, %v368
  %v597 = vpack.c.b16 %v373, %v371
  %v598 = vpack.c.b16 %v374, %v372
  %v599 = vpack.c.b16 %v377, %v375
  %v600 = vpack.c.b16 %v378, %v376
  %v601 = vpack.c.b16 %v381, %v379
  %v602 = vpack.c.b16 %v382, %v380
  %v603 = vpack.c.b16 %v385, %v383
  %v604 = vpack.c.b16 %v386, %v384
  %v605 = vpack.c.b16 %v389, %v387
  %v606 = vpack.c.b16 %v390, %v388
  %v607 = vpack.c.b16 %v393, %v391
  %v608 = vpack.c.b16 %v394, %v392
  %v609 = vpack.c.b16 %v397, %v395
  %v610 = vpack.c.b16 %v398, %v396
  %v611 = vpack.c.b16 %v401, %v399
  %v612 = vpack.c.b16 %v402, %v400
  %v613 = vpack.c.b16 %v405, %v403
  %v614 = vpack.c.b16 %v406, %v404
  %v615 = vpack.c.b16 %v409, %v407
  %v616 = vpack.c.b16 %v410, %v408
  %v617 = vpack.c.b16 %v413, %v411
  %v618 = vpack.c.b16 %v414, %v412
  %v619 = vpack.c.b16 %v417, %v415
  %v620 = vpack.c.b16 %v418, %v416
  %v621 = vpack.c.b16 %v421, %v419
  %v622 = vpack.c.b16 %v422, %v420
  %v623 = vpack.c.b16 %v425, %v423
  %v624 = vpack.c.b16 %v426, %v424
  %v625 = vpack.c.b16 %v429, %v427
  %v626 = vpack.c.b16 %v430, %v428
  %v627 = vpack.c.b16 %v433, %v431
  %v628 = vpack.c.b16 %v434, %v432
  %v629 = vpack.c.b16 %v437, %v435
  %v630 = vpack.c.b16 %v438, %v436
  %v631 = vpack.c.b16 %v441, %v439
  %v632 = vpack.c.b16 %v442, %v440
  %v633 = vpack.c.b16 %v445, %v443
  %v634 = vpack.c.b16 %v446, %v444
  %v635 = vpack.c.b16 %v449, %v447
  %v636 = vpack.c.b16 %v450, %v448
  %v637 = vpack.c.b16 %v453, %v451
  %v638 = vpack.c.b16 %v454, %v452
  %v639 = vpack.c.b16 %v457, %v455
  %v640 = vpack.c.b16 %v458, %v456
  %v641 = vpack.c.b16 %v461, %v459
  %v642 = vpack.c.b16 %v462, %v460
  %v643 = vpack.c.b16 %v465, %v463
  %v644 = vpack.c.b16 %v466, %v464
  %v645 = vpack.c.b16 %v469, %v467
  %v646 = vpack.c.b16 %v470, %v468
  %v647 = vpack.c.b16 %v473, %v471
  %v648 = vpack.c.b16 %v474, %v472
  %v649 = vpack.c.b16 %v477, %v475
  %v650 = vpack.c.b16 %v478, %v476
  %v651 = vpack.c.b16 %v481, %v479
  %v652 = vpack.c.b16 %v482, %v480
  %v653 = vpack.c.b16 %v485, %v483
  %v654 = vpack.c.b16 %v486, %v484
  %v655 = vpack.c.b16 %v489, %v487
  %v656 = vpack.c.b16 %v490, %v488
  %v657 = vpack.c.b16 %v493, %v491
  %v658 = vpack.c.b16 %v494, %v492
  %v659 = vpack.c.b16 %v497, %v495
  %v660 = vpack.c.b16 %v498, %v496
  %v661 = vpack.c.b16 %v501, %v499
  %v662 = vpack.c.b16 %v502, %v500
  %v663 = vpack.c.b16 %v505, %v503
  %v664 = vpack.c.b16 %v506, %v504
  %v665 = vpack.c.b16 %v509, %v507
  %v666 = vpack.c.b16 %v510, %v508
  %v667 = vpack.c.b16 %v513, %v511
  %v668 = vpack.c.b16 %v514, %v512
  %v669 = vpack.c.b16 %v517, %v515
  %v670 = vpack.c.b16 %v518, %v516
  %v671 = vpack.c.b16 %v521, %v519
  %v672 = vpack.c.b16 %v522, %v520
  %v673 = vpack.c.b16 %v525, %v523
  %v674 = vpack.c.b16 %v526, %v524
  %v675 = vpack.c.b16 %v529, %v527
  %v676 = vpack.c.b16 %v530, %v528
  %v677 = vpack.c.b16 %v533, %v531
  %v678 = vpack.c.b16 %v534, %v532
  %v679 = vpack.c.b16 %v537, %v535
  %v680 = vpack.c.b16 %v538, %v536
  %v681 = vpack.c.b16 %v541, %v539
  %v682 = vpack.c.b16 %v542, %v540
  %v683 = vpack.c.b16 %v545, %v543
  %v684 = vpack.c.b16 %v546, %v544
  %v685 = vpack.c.b16 %v549, %v547
  %v686 = vpack.c.b16 %v550, %v548
  %v687 = vpack.c.b16 %v553, %v551
  %v688 = vpack.c.b16 %v554, %v552
  %v689 = vpack.c.b16 %v557, %v555
  %v690 = vpack.c.b16 %v558, %v556
  %v691 = vpack.c.b16 %v561, %v559
  %v692 = vpack.c.b16 %v562, %v560
  %v693 = vpack.c.b16 %v565, %v563
  %v694 = vpack.c.b16 %v566, %v564
  %823 = vmatprep.subr.bf16.mxu0 %v568
  %824 = vmatpush1.bf16.msra.mxu0 %v567
  %825 = vmatprep.subr.bf16.mxu0 %v570
  %826 = vmatpush1.bf16.msra.mxu0 %v569
  %827 = vmatprep.subr.bf16.mxu0 %v572
  %828 = vmatpush1.bf16.msra.mxu0 %v571
  %829 = vmatprep.subr.bf16.mxu0 %v574
  %830 = vmatpush1.bf16.msra.mxu0 %v573
  %831 = vmatprep.subr.bf16.mxu0 %v576
  %832 = vmatpush1.bf16.msra.mxu0 %v575
  %833 = vmatprep.subr.bf16.mxu0 %v578
  %834 = vmatpush1.bf16.msra.mxu0 %v577
  %835 = vmatprep.subr.bf16.mxu0 %v580
  %836 = vmatpush1.bf16.msra.mxu0 %v579
  %837 = vmatprep.subr.bf16.mxu0 %v582
  %838 = vmatpush1.bf16.msra.mxu0 %v581
  %839 = vmatprep.subr.bf16.mxu0 %v584
  %840 = vmatpush1.bf16.msra.mxu0 %v583
  %841 = vmatprep.subr.bf16.mxu0 %v586
  %842 = vmatpush1.bf16.msra.mxu0 %v585
  %843 = vmatprep.subr.bf16.mxu0 %v588
  %844 = vmatpush1.bf16.msra.mxu0 %v587
  %845 = vmatprep.subr.bf16.mxu0 %v590
  %846 = vmatpush1.bf16.msra.mxu0 %v589
  %847 = vmatprep.subr.bf16.mxu0 %v592
  %848 = vmatpush1.bf16.msra.mxu0 %v591
  %849 = vmatprep.subr.bf16.mxu0 %v594
  %850 = vmatpush1.bf16.msra.mxu0 %v593
  %851 = vmatprep.subr.bf16.mxu0 %v596
  %852 = vmatpush1.bf16.msra.mxu0 %v595
  %853 = vmatprep.subr.bf16.mxu0 %v598
  %854 = vmatpush1.bf16.msra.mxu0 %v597
  %855 = vmatprep.mubr.bf16.mxu0 %v36
  %856 = vmatmul.mubr.bf16.gmra.mrb[0].mxu0 %v35
  %v857 = vpop.f32.mrb[0].mxu0
  %v858 = vadd.f32 %v176, %v857
  %v859 = vpop.f32.mrb[0].mxu0
  %v860 = vadd.f32 %v180, %v859
  %v861 = vpop.f32.mrb[0].mxu0
  %v862 = vpop.f32.mrb[0].mxu0
  %863 = vdwg.mxu0
  %864 = vmatprep.subr.bf16.mxu0 %v600
  %865 = vmatpush1.bf16.msra.mxu0 %v599
  %866 = vmatprep.subr.bf16.mxu0 %v602
  %867 = vmatpush1.bf16.msra.mxu0 %v601
  %868 = vmatprep.subr.bf16.mxu0 %v604
  %869 = vmatpush1.bf16.msra.mxu0 %v603
  %870 = vmatprep.subr.bf16.mxu0 %v606
  %871 = vmatpush1.bf16.msra.mxu0 %v605
  %872 = vmatprep.subr.bf16.mxu0 %v608
  %873 = vmatpush1.bf16.msra.mxu0 %v607
  %874 = vmatprep.subr.bf16.mxu0 %v610
  %875 = vmatpush1.bf16.msra.mxu0 %v609
  %876 = vmatprep.subr.bf16.mxu0 %v612
  %877 = vmatpush1.bf16.msra.mxu0 %v611
  %878 = vmatprep.subr.bf16.mxu0 %v614
  %879 = vmatpush1.bf16.msra.mxu0 %v613
  %880 = vmatprep.subr.bf16.mxu0 %v616
  %881 = vmatpush1.bf16.msra.mxu0 %v615
  %882 = vmatprep.subr.bf16.mxu0 %v618
  %883 = vmatpush1.bf16.msra.mxu0 %v617
  %884 = vmatprep.subr.bf16.mxu0 %v620
  %885 = vmatpush1.bf16.msra.mxu0 %v619
  %886 = vmatprep.subr.bf16.mxu0 %v622
  %887 = vmatpush1.bf16.msra.mxu0 %v621
  %888 = vmatprep.subr.bf16.mxu0 %v624
  %889 = vmatpush1.bf16.msra.mxu0 %v623
  %890 = vmatprep.subr.bf16.mxu0 %v626
  %891 = vmatpush1.bf16.msra.mxu0 %v625
  %892 = vmatprep.subr.bf16.mxu0 %v628
  %893 = vmatpush1.bf16.msra.mxu0 %v627
  %894 = vmatprep.subr.bf16.mxu0 %v630
  %895 = vmatpush1.bf16.msra.mxu0 %v629
  %896 = vmatprep.mubr.bf16.mxu0 %v38
  %897 = vmatmul.mubr.bf16.gmra.mrb[0].mxu0 %v37
  %v898 = vpop.f32.mrb[0].mxu0
  %v899 = vadd.f32 %v858, %v898
  %v900 = vpop.f32.mrb[0].mxu0
  %v901 = vadd.f32 %v860, %v900
  %v902 = vpop.f32.mrb[0].mxu0
  %v903 = vpop.f32.mrb[0].mxu0
  %904 = vdwg.mxu0
  %905 = vmatprep.subr.bf16.mxu0 %v632
  %906 = vmatpush1.bf16.msra.mxu0 %v631
  %907 = vmatprep.subr.bf16.mxu0 %v634
  %908 = vmatpush1.bf16.msra.mxu0 %v633
  %909 = vmatprep.subr.bf16.mxu0 %v636
  %910 = vmatpush1.bf16.msra.mxu0 %v635
  %911 = vmatprep.subr.bf16.mxu0 %v638
  %912 = vmatpush1.bf16.msra.mxu0 %v637
  %913 = vmatprep.subr.bf16.mxu0 %v640
  %914 = vmatpush1.bf16.msra.mxu0 %v639
  %915 = vmatprep.subr.bf16.mxu0 %v642
  %916 = vmatpush1.bf16.msra.mxu0 %v641
  %917 = vmatprep.subr.bf16.mxu0 %v644
  %918 = vmatpush1.bf16.msra.mxu0 %v643
  %919 = vmatprep.subr.bf16.mxu0 %v646
  %920 = vmatpush1.bf16.msra.mxu0 %v645
  %921 = vmatprep.subr.bf16.mxu0 %v648
  %922 = vmatpush1.bf16.msra.mxu0 %v647
  %923 = vmatprep.subr.bf16.mxu0 %v650
  %924 = vmatpush1.bf16.msra.mxu0 %v649
  %925 = vmatprep.subr.bf16.mxu0 %v652
  %926 = vmatpush1.bf16.msra.mxu0 %v651
  %927 = vmatprep.subr.bf16.mxu0 %v654
  %928 = vmatpush1.bf16.msra.mxu0 %v653
  %929 = vmatprep.subr.bf16.mxu0 %v656
  %930 = vmatpush1.bf16.msra.mxu0 %v655
  %931 = vmatprep.subr.bf16.mxu0 %v658
  %932 = vmatpush1.bf16.msra.mxu0 %v657
  %933 = vmatprep.subr.bf16.mxu0 %v660
  %934 = vmatpush1.bf16.msra.mxu0 %v659
  %935 = vmatprep.subr.bf16.mxu0 %v662
  %936 = vmatpush1.bf16.msra.mxu0 %v661
  %937 = vmatprep.mubr.bf16.mxu0 %v40
  %938 = vmatmul.mubr.bf16.gmra.mrb[0].mxu0 %v39
  %v939 = vpop.f32.mrb[0].mxu0
  %v940 = vadd.f32 %v899, %v939
  %v941 = vpop.f32.mrb[0].mxu0
  %v942 = vadd.f32 %v901, %v941
  %v943 = vpop.f32.mrb[0].mxu0
  %v944 = vpop.f32.mrb[0].mxu0
  %945 = vdwg.mxu0
  %946 = vmatprep.subr.bf16.mxu0 %v664
  %947 = vmatpush1.bf16.msra.mxu0 %v663
  %948 = vmatprep.subr.bf16.mxu0 %v666
  %949 = vmatpush1.bf16.msra.mxu0 %v665
  %950 = vmatprep.subr.bf16.mxu0 %v668
  %951 = vmatpush1.bf16.msra.mxu0 %v667
  %952 = vmatprep.subr.bf16.mxu0 %v670
  %953 = vmatpush1.bf16.msra.mxu0 %v669
  %954 = vmatprep.subr.bf16.mxu0 %v672
  %955 = vmatpush1.bf16.msra.mxu0 %v671
  %956 = vmatprep.subr.bf16.mxu0 %v674
  %957 = vmatpush1.bf16.msra.mxu0 %v673
  %958 = vmatprep.subr.bf16.mxu0 %v676
  %959 = vmatpush1.bf16.msra.mxu0 %v675
  %960 = vmatprep.subr.bf16.mxu0 %v678
  %961 = vmatpush1.bf16.msra.mxu0 %v677
  %962 = vmatprep.subr.bf16.mxu0 %v680
  %963 = vmatpush1.bf16.msra.mxu0 %v679
  %964 = vmatprep.subr.bf16.mxu0 %v682
  %965 = vmatpush1.bf16.msra.mxu0 %v681
  %966 = vmatprep.subr.bf16.mxu0 %v684
  %967 = vmatpush1.bf16.msra.mxu0 %v683
  %968 = vmatprep.subr.bf16.mxu0 %v686
  %969 = vmatpush1.bf16.msra.mxu0 %v685
  %970 = vmatprep.subr.bf16.mxu0 %v688
  %971 = vmatpush1.bf16.msra.mxu0 %v687
  %972 = vmatprep.subr.bf16.mxu0 %v690
  %973 = vmatpush1.bf16.msra.mxu0 %v689
  %974 = vmatprep.subr.bf16.mxu0 %v692
  %975 = vmatpush1.bf16.msra.mxu0 %v691
  %976 = vmatprep.subr.bf16.mxu0 %v694
  %977 = vmatpush1.bf16.msra.mxu0 %v693
  %978 = vmatprep.mubr.bf16.mxu0 %v42
  %979 = vmatmul.mubr.bf16.gmra.mrb[0].mxu0 %v41
  %v980 = vpop.f32.mrb[0].mxu0
  %v981 = vadd.f32 %v940, %v980
  %v982 = vpop.f32.mrb[0].mxu0
  %v983 = vadd.f32 %v942, %v982
  %v984 = vpop.f32.mrb[0].mxu0
  %v985 = vpop.f32.mrb[0].mxu0
  %986 = vdwg.mxu0
  %v987 = vsub.f32 0.0, %v981
  %v988 = vsub.f32 0.0, %v983
  %v989 = vmul.f32 %v987, 1.442695
  %v990 = vpow.pop %v989
  %v991 = vmul.f32 %v988, 1.442695
  %v992 = vpow.pop %v991
  %v993 = vadd.f32 %v990, 1.0
  %v994 = vadd.f32 %v992, 1.0
  %v995 = vrcp.pop %v993
  %v996 = vmul.f32 %v981, %v995
  %v997 = vrcp.pop %v994
  %v998 = vmul.f32 %v983, %v997
  %v999 = vpack.c.bf16 %v996, %v996
  %v1000 = vpack.c.bf16 %v998, %v998
  %v1001 = vld [vmem:[%s3] sm:$0xff]
  %v1002 = vld [vmem:[%s3 + $0x8] sm:$0xff]
  %v1003 = vld [vmem:[%s3 + $0x10] sm:$0xff]
  %v1004 = vld [vmem:[%s3 + $0x18] sm:$0xff]
  %v1005 = vld [vmem:[%s3 + $0x20] sm:$0xff]
  %v1006 = vld [vmem:[%s3 + $0x28] sm:$0xff]
  %v1007 = vld [vmem:[%s3 + $0x30] sm:$0xff]
  %v1008 = vld [vmem:[%s3 + $0x38] sm:$0xff]
  %v1009 = vld [vmem:[%s3 + $0x40] sm:$0xff]
  %v1010 = vld [vmem:[%s3 + $0x48] sm:$0xff]
  %v1011 = vld [vmem:[%s3 + $0x50] sm:$0xff]
  %v1012 = vld [vmem:[%s3 + $0x58] sm:$0xff]
  %v1013 = vld [vmem:[%s3 + $0x60] sm:$0xff]
  %v1014 = vld [vmem:[%s3 + $0x68] sm:$0xff]
  %v1015 = vld [vmem:[%s3 + $0x70] sm:$0xff]
  %v1016 = vld [vmem:[%s3 + $0x78] sm:$0xff]
  %v1017 = vld [vmem:[%s3 + $0x80] sm:$0xff]
  %v1018 = vld [vmem:[%s3 + $0x88] sm:$0xff]
  %v1019 = vld [vmem:[%s3 + $0x90] sm:$0xff]
  %v1020 = vld [vmem:[%s3 + $0x98] sm:$0xff]
  %v1021 = vld [vmem:[%s3 + $0xa0] sm:$0xff]
  %v1022 = vld [vmem:[%s3 + $0xa8] sm:$0xff]
  %v1023 = vld [vmem:[%s3 + $0xb0] sm:$0xff]
  %v1024 = vld [vmem:[%s3 + $0xb8] sm:$0xff]
  %v1025 = vld [vmem:[%s3 + $0xc0] sm:$0xff]
  %v1026 = vld [vmem:[%s3 + $0xc8] sm:$0xff]
  %v1027 = vld [vmem:[%s3 + $0xd0] sm:$0xff]
  %v1028 = vld [vmem:[%s3 + $0xd8] sm:$0xff]
  %v1029 = vld [vmem:[%s3 + $0xe0] sm:$0xff]
  %v1030 = vld [vmem:[%s3 + $0xe8] sm:$0xff]
  %v1031 = vld [vmem:[%s3 + $0xf0] sm:$0xff]
  %v1032 = vld [vmem:[%s3 + $0xf8] sm:$0xff]
  %v1033 = vld [vmem:[%s4] sm:$0x3]
  %v1035 = vlaneseq
  %v1036 = vshrl.u32 %v1035, 7
  %v1037 = vsub.s32 0, %v1036
  %v1038 = vrot.slane %v1033, %v1037
  %v1039 = vlaneseq
  %v1040 = vshrl.u32 %v1039, 7
  %v1041 = vsub.s32 1, %v1040
  %v1042 = vrot.slane %v1033, %v1041
  %v1077 = vunpack.c.l.b16 %v1001
  %v1078 = vunpack.c.h.b16 %v1001
  %v1079 = vunpack.c.l.b16 %v1002
  %v1080 = vunpack.c.h.b16 %v1002
  %v1081 = vunpack.c.l.b16 %v1003
  %v1082 = vunpack.c.h.b16 %v1003
  %v1083 = vunpack.c.l.b16 %v1004
  %v1084 = vunpack.c.h.b16 %v1004
  %v1085 = vunpack.c.l.b16 %v1005
  %v1086 = vunpack.c.h.b16 %v1005
  %v1087 = vunpack.c.l.b16 %v1006
  %v1088 = vunpack.c.h.b16 %v1006
  %v1089 = vunpack.c.l.b16 %v1007
  %v1090 = vunpack.c.h.b16 %v1007
  %v1091 = vunpack.c.l.b16 %v1008
  %v1092 = vunpack.c.h.b16 %v1008
  %v1093 = vunpack.c.l.b16 %v1009
  %v1094 = vunpack.c.h.b16 %v1009
  %v1095 = vunpack.c.l.b16 %v1010
  %v1096 = vunpack.c.h.b16 %v1010
  %v1097 = vunpack.c.l.b16 %v1011
  %v1098 = vunpack.c.h.b16 %v1011
  %v1099 = vunpack.c.l.b16 %v1012
  %v1100 = vunpack.c.h.b16 %v1012
  %v1101 = vunpack.c.l.b16 %v1013
  %v1102 = vunpack.c.h.b16 %v1013
  %v1103 = vunpack.c.l.b16 %v1014
  %v1104 = vunpack.c.h.b16 %v1014
  %v1105 = vunpack.c.l.b16 %v1015
  %v1106 = vunpack.c.h.b16 %v1015
  %v1107 = vunpack.c.l.b16 %v1016
  %v1108 = vunpack.c.h.b16 %v1016
  %v1109 = vunpack.c.l.b16 %v1017
  %v1110 = vunpack.c.h.b16 %v1017
  %v1111 = vunpack.c.l.b16 %v1018
  %v1112 = vunpack.c.h.b16 %v1018
  %v1113 = vunpack.c.l.b16 %v1019
  %v1114 = vunpack.c.h.b16 %v1019
  %v1115 = vunpack.c.l.b16 %v1020
  %v1116 = vunpack.c.h.b16 %v1020
  %v1117 = vunpack.c.l.b16 %v1021
  %v1118 = vunpack.c.h.b16 %v1021
  %v1119 = vunpack.c.l.b16 %v1022
  %v1120 = vunpack.c.h.b16 %v1022
  %v1121 = vunpack.c.l.b16 %v1023
  %v1122 = vunpack.c.h.b16 %v1023
  %v1123 = vunpack.c.l.b16 %v1024
  %v1124 = vunpack.c.h.b16 %v1024
  %v1125 = vunpack.c.l.b16 %v1025
  %v1126 = vunpack.c.h.b16 %v1025
  %v1127 = vunpack.c.l.b16 %v1026
  %v1128 = vunpack.c.h.b16 %v1026
  %v1129 = vunpack.c.l.b16 %v1027
  %v1130 = vunpack.c.h.b16 %v1027
  %v1131 = vunpack.c.l.b16 %v1028
  %v1132 = vunpack.c.h.b16 %v1028
  %v1133 = vunpack.c.l.b16 %v1029
  %v1134 = vunpack.c.h.b16 %v1029
  %v1135 = vunpack.c.l.b16 %v1030
  %v1136 = vunpack.c.h.b16 %v1030
  %v1137 = vunpack.c.l.b16 %v1031
  %v1138 = vunpack.c.h.b16 %v1031
  %v1139 = vunpack.c.l.b16 %v1032
  %v1140 = vunpack.c.h.b16 %v1032
  %v1141 = vpack.c.b16 %v1079, %v1077
  %v1142 = vpack.c.b16 %v1080, %v1078
  %v1143 = vpack.c.b16 %v1083, %v1081
  %v1144 = vpack.c.b16 %v1084, %v1082
  %v1145 = vpack.c.b16 %v1087, %v1085
  %v1146 = vpack.c.b16 %v1088, %v1086
  %v1147 = vpack.c.b16 %v1091, %v1089
  %v1148 = vpack.c.b16 %v1092, %v1090
  %v1149 = vpack.c.b16 %v1095, %v1093
  %v1150 = vpack.c.b16 %v1096, %v1094
  %v1151 = vpack.c.b16 %v1099, %v1097
  %v1152 = vpack.c.b16 %v1100, %v1098
  %v1153 = vpack.c.b16 %v1103, %v1101
  %v1154 = vpack.c.b16 %v1104, %v1102
  %v1155 = vpack.c.b16 %v1107, %v1105
  %v1156 = vpack.c.b16 %v1108, %v1106
  %v1157 = vpack.c.b16 %v1111, %v1109
  %v1158 = vpack.c.b16 %v1112, %v1110
  %v1159 = vpack.c.b16 %v1115, %v1113
  %v1160 = vpack.c.b16 %v1116, %v1114
  %v1161 = vpack.c.b16 %v1119, %v1117
  %v1162 = vpack.c.b16 %v1120, %v1118
  %v1163 = vpack.c.b16 %v1123, %v1121
  %v1164 = vpack.c.b16 %v1124, %v1122
  %v1165 = vpack.c.b16 %v1127, %v1125
  %v1166 = vpack.c.b16 %v1128, %v1126
  %v1167 = vpack.c.b16 %v1131, %v1129
  %v1168 = vpack.c.b16 %v1132, %v1130
  %v1169 = vpack.c.b16 %v1135, %v1133
  %v1170 = vpack.c.b16 %v1136, %v1134
  %v1171 = vpack.c.b16 %v1139, %v1137
  %v1172 = vpack.c.b16 %v1140, %v1138
  %1205 = vmatprep.subr.bf16.mxu0 %v1142
  %1206 = vmatpush1.bf16.msra.mxu0 %v1141
  %1207 = vmatprep.subr.bf16.mxu0 %v1144
  %1208 = vmatpush1.bf16.msra.mxu0 %v1143
  %1209 = vmatprep.subr.bf16.mxu0 %v1146
  %1210 = vmatpush1.bf16.msra.mxu0 %v1145
  %1211 = vmatprep.subr.bf16.mxu0 %v1148
  %1212 = vmatpush1.bf16.msra.mxu0 %v1147
  %1213 = vmatprep.subr.bf16.mxu0 %v1150
  %1214 = vmatpush1.bf16.msra.mxu0 %v1149
  %1215 = vmatprep.subr.bf16.mxu0 %v1152
  %1216 = vmatpush1.bf16.msra.mxu0 %v1151
  %1217 = vmatprep.subr.bf16.mxu0 %v1154
  %1218 = vmatpush1.bf16.msra.mxu0 %v1153
  %1219 = vmatprep.subr.bf16.mxu0 %v1156
  %1220 = vmatpush1.bf16.msra.mxu0 %v1155
  %1221 = vmatprep.subr.bf16.mxu0 %v1158
  %1222 = vmatpush1.bf16.msra.mxu0 %v1157
  %1223 = vmatprep.subr.bf16.mxu0 %v1160
  %1224 = vmatpush1.bf16.msra.mxu0 %v1159
  %1225 = vmatprep.subr.bf16.mxu0 %v1162
  %1226 = vmatpush1.bf16.msra.mxu0 %v1161
  %1227 = vmatprep.subr.bf16.mxu0 %v1164
  %1228 = vmatpush1.bf16.msra.mxu0 %v1163
  %1229 = vmatprep.subr.bf16.mxu0 %v1166
  %1230 = vmatpush1.bf16.msra.mxu0 %v1165
  %1231 = vmatprep.subr.bf16.mxu0 %v1168
  %1232 = vmatpush1.bf16.msra.mxu0 %v1167
  %1233 = vmatprep.subr.bf16.mxu0 %v1170
  %1234 = vmatpush1.bf16.msra.mxu0 %v1169
  %1235 = vmatprep.subr.bf16.mxu0 %v1172
  %1236 = vmatpush1.bf16.msra.mxu0 %v1171
  %1237 = vmatprep.mubr.bf16.mxu0 %v1000
  %1238 = vmatmul.mubr.bf16.gmra.mrb[0].mxu0 %v999
  %v1239 = vpop.f32.mrb[0].mxu0
  %v1240 = vadd.f32 %v1038, %v1239
  %v1241 = vpop.f32.mrb[0].mxu0
  %v1242 = vadd.f32 %v1042, %v1241
  %v1243 = vpop.f32.mrb[0].mxu0
  %v1244 = vpop.f32.mrb[0].mxu0
  %1245 = vdwg.mxu0
  %v1246 = vsub.f32 0.0, %v1240
  %v1247 = vsub.f32 0.0, %v1242
  %v1248 = vmul.f32 %v1246, 1.442695
  %v1249 = vpow.pop %v1248
  %v1250 = vmul.f32 %v1247, 1.442695
  %v1251 = vpow.pop %v1250
  %v1252 = vadd.f32 %v1249, 1.0
  %v1253 = vadd.f32 %v1251, 1.0
  %v1254 = vrcp.pop %v1252
  %v1255 = vmul.f32 %v1240, %v1254
  %v1256 = vrcp.pop %v1253
  %v1257 = vmul.f32 %v1242, %v1256
  %v1258 = vpack.c.bf16 %v1255, %v1255
  %v1259 = vpack.c.bf16 %v1257, %v1257
  %v1260 = vld [vmem:[%s5] sm:$0xf]
  %v1261 = vld [vmem:[%s5 + $0x4] sm:$0xf]
  %v1262 = vld [vmem:[%s5 + $0x8] sm:$0xf]
  %v1263 = vld [vmem:[%s5 + $0xc] sm:$0xf]
  %v1264 = vld [vmem:[%s5 + $0x10] sm:$0xf]
  %v1265 = vld [vmem:[%s5 + $0x14] sm:$0xf]
  %v1266 = vld [vmem:[%s5 + $0x18] sm:$0xf]
  %v1267 = vld [vmem:[%s5 + $0x1c] sm:$0xf]
  %v1268 = vld [vmem:[%s5 + $0x20] sm:$0xf]
  %v1269 = vld [vmem:[%s5 + $0x24] sm:$0xf]
  %v1270 = vld [vmem:[%s5 + $0x28] sm:$0xf]
  %v1271 = vld [vmem:[%s5 + $0x2c] sm:$0xf]
  %v1272 = vld [vmem:[%s5 + $0x30] sm:$0xf]
  %v1273 = vld [vmem:[%s5 + $0x34] sm:$0xf]
  %v1274 = vld [vmem:[%s5 + $0x38] sm:$0xf]
  %v1275 = vld [vmem:[%s5 + $0x3c] sm:$0xf]
  %v1276 = vld [vmem:[%s5 + $0x40] sm:$0xf]
  %v1277 = vld [vmem:[%s5 + $0x44] sm:$0xf]
  %v1278 = vld [vmem:[%s5 + $0x48] sm:$0xf]
  %v1279 = vld [vmem:[%s5 + $0x4c] sm:$0xf]
  %v1280 = vld [vmem:[%s5 + $0x50] sm:$0xf]
  %v1281 = vld [vmem:[%s5 + $0x54] sm:$0xf]
  %v1282 = vld [vmem:[%s5 + $0x58] sm:$0xf]
  %v1283 = vld [vmem:[%s5 + $0x5c] sm:$0xf]
  %v1284 = vld [vmem:[%s5 + $0x60] sm:$0xf]
  %v1285 = vld [vmem:[%s5 + $0x64] sm:$0xf]
  %v1286 = vld [vmem:[%s5 + $0x68] sm:$0xf]
  %v1287 = vld [vmem:[%s5 + $0x6c] sm:$0xf]
  %v1288 = vld [vmem:[%s5 + $0x70] sm:$0xf]
  %v1289 = vld [vmem:[%s5 + $0x74] sm:$0xf]
  %v1290 = vld [vmem:[%s5 + $0x78] sm:$0xf]
  %v1291 = vld [vmem:[%s5 + $0x7c] sm:$0xf]
  %v1292 = vld [vmem:[%s6] sm:$0x1]
  %v1294 = vlaneseq
  %v1295 = vshrl.u32 %v1294, 7
  %v1296 = vsub.s32 0, %v1295
  %v1297 = vrot.slane %v1292, %v1296
  %v1331 = vunpack.c.l.b16 %v1260
  %v1332 = vunpack.c.l.b16 %v1261
  %v1333 = vunpack.c.l.b16 %v1262
  %v1334 = vunpack.c.l.b16 %v1263
  %v1335 = vunpack.c.l.b16 %v1264
  %v1336 = vunpack.c.l.b16 %v1265
  %v1337 = vunpack.c.l.b16 %v1266
  %v1338 = vunpack.c.l.b16 %v1267
  %v1339 = vunpack.c.l.b16 %v1268
  %v1340 = vunpack.c.l.b16 %v1269
  %v1341 = vunpack.c.l.b16 %v1270
  %v1342 = vunpack.c.l.b16 %v1271
  %v1343 = vunpack.c.l.b16 %v1272
  %v1344 = vunpack.c.l.b16 %v1273
  %v1345 = vunpack.c.l.b16 %v1274
  %v1346 = vunpack.c.l.b16 %v1275
  %v1347 = vunpack.c.l.b16 %v1276
  %v1348 = vunpack.c.l.b16 %v1277
  %v1349 = vunpack.c.l.b16 %v1278
  %v1350 = vunpack.c.l.b16 %v1279
  %v1351 = vunpack.c.l.b16 %v1280
  %v1352 = vunpack.c.l.b16 %v1281
  %v1353 = vunpack.c.l.b16 %v1282
  %v1354 = vunpack.c.l.b16 %v1283
  %v1355 = vunpack.c.l.b16 %v1284
  %v1356 = vunpack.c.l.b16 %v1285
  %v1357 = vunpack.c.l.b16 %v1286
  %v1358 = vunpack.c.l.b16 %v1287
  %v1359 = vunpack.c.l.b16 %v1288
  %v1360 = vunpack.c.l.b16 %v1289
  %v1361 = vunpack.c.l.b16 %v1290
  %v1362 = vunpack.c.l.b16 %v1291
  %v1363 = vpack.c.b16 %v1332, %v1331
  %v1364 = vpack.c.b16 %v1334, %v1333
  %v1365 = vpack.c.b16 %v1336, %v1335
  %v1366 = vpack.c.b16 %v1338, %v1337
  %v1367 = vpack.c.b16 %v1340, %v1339
  %v1368 = vpack.c.b16 %v1342, %v1341
  %v1369 = vpack.c.b16 %v1344, %v1343
  %v1370 = vpack.c.b16 %v1346, %v1345
  %v1371 = vpack.c.b16 %v1348, %v1347
  %v1372 = vpack.c.b16 %v1350, %v1349
  %v1373 = vpack.c.b16 %v1352, %v1351
  %v1374 = vpack.c.b16 %v1354, %v1353
  %v1375 = vpack.c.b16 %v1356, %v1355
  %v1376 = vpack.c.b16 %v1358, %v1357
  %v1377 = vpack.c.b16 %v1360, %v1359
  %v1378 = vpack.c.b16 %v1362, %v1361
  %1395 = vmatprep.subr.bf16.mxu0 0
  %1396 = vmatpush1.bf16.msra.mxu0 %v1363
  %1397 = vmatprep.subr.bf16.mxu0 0
  %1398 = vmatpush1.bf16.msra.mxu0 %v1364
  %1399 = vmatprep.subr.bf16.mxu0 0
  %1400 = vmatpush1.bf16.msra.mxu0 %v1365
  %1401 = vmatprep.subr.bf16.mxu0 0
  %1402 = vmatpush1.bf16.msra.mxu0 %v1366
  %1403 = vmatprep.subr.bf16.mxu0 0
  %1404 = vmatpush1.bf16.msra.mxu0 %v1367
  %1405 = vmatprep.subr.bf16.mxu0 0
  %1406 = vmatpush1.bf16.msra.mxu0 %v1368
  %1407 = vmatprep.subr.bf16.mxu0 0
  %1408 = vmatpush1.bf16.msra.mxu0 %v1369
  %1409 = vmatprep.subr.bf16.mxu0 0
  %1410 = vmatpush1.bf16.msra.mxu0 %v1370
  %1411 = vmatprep.subr.bf16.mxu0 0
  %1412 = vmatpush1.bf16.msra.mxu0 %v1371
  %1413 = vmatprep.subr.bf16.mxu0 0
  %1414 = vmatpush1.bf16.msra.mxu0 %v1372
  %1415 = vmatprep.subr.bf16.mxu0 0
  %1416 = vmatpush1.bf16.msra.mxu0 %v1373
  %1417 = vmatprep.subr.bf16.mxu0 0
  %1418 = vmatpush1.bf16.msra.mxu0 %v1374
  %1419 = vmatprep.subr.bf16.mxu0 0
  %1420 = vmatpush1.bf16.msra.mxu0 %v1375
  %1421 = vmatprep.subr.bf16.mxu0 0
  %1422 = vmatpush1.bf16.msra.mxu0 %v1376
  %1423 = vmatprep.subr.bf16.mxu0 0
  %1424 = vmatpush1.bf16.msra.mxu0 %v1377
  %1425 = vmatprep.subr.bf16.mxu0 0
  %1426 = vmatpush1.bf16.msra.mxu0 %v1378
  %1427 = vmatprep.mubr.bf16.mxu0 %v1259
  %1428 = vmatmul.mubr.bf16.gmra.mrb[0].mxu0 %v1258
  %v1429 = vpop.f32.mrb[0].mxu0
  %v1430 = vadd.f32 %v1297, %v1429
  %v1431 = vpop.f32.mrb[0].mxu0
  %v1432 = vpop.f32.mrb[0].mxu0
  %v1433 = vpop.f32.mrb[0].mxu0
  %1434 = vdwg.mxu0
  %1435 = vst [vmem:[%s7] sm:$0xff] %v1430
  // Predicated region
  $region30: #{_forward_impl.1} parent=0 // pred_check
    _
  $region31: #{_forward_impl.1} parent=0 // pred_check_branch
    %1437 = sbr.rel (0) target = $region33
  $region32: #{_forward_impl.1} parent=0 // pred_region
    _
  $region33: #{_forward_impl.1} parent=0 // pred_fallthru
    _
  // Predicated region
  $region34: #{_forward_impl.1} parent=0 // pred_check
    _
  $region35: #{_forward_impl.1} parent=0 // pred_check_branch
    %1439 = sbr.rel (0) target = $region37
  $region36: #{_forward_impl.1} parent=0 // pred_region
    _
  $region37: #{_forward_impl.1} parent=0 // pred_fallthru
    _

</llo_original>
